<compile_context>
chip_gen: v7x
topology: tpu7x:2x2x1
jax: 0.10.0
libtpu: 0.0.40
codegen_flags: <defaults>
</compile_context>

<pallas_src>
import functools

import jax
import jax.numpy as jnp
import numpy as np
from jax import lax
from jax.experimental import pallas as pl
from jax.experimental.pallas import tpu as pltpu


def _round_up(x, m):
  return (x + m - 1) // m * m


def _lstm_encoder_kernel(x_ref, wih_ref, whh_ref, b_ref, wo_ref, bo_ref,
                         out_ref, *, b_blk, seq_len, hp):
  """One batch-block: fused LSTM recurrence + fused [mean|logvar] head.

  Time-major layout inside the block: row r = t * b_blk + b.
    x_ref   : (T*Bb, D_in)  bf16
    wih_ref : (D_in, 4*Hp)  bf16   (each gate's columns lane-padded to Hp)
    whh_ref : (Hp, 4*Hp)    bf16
    b_ref   : (1, 4*Hp)     f32    (b_ih + b_hh, lane-padded)
    wo_ref  : (Hp, 2*Z)     bf16   ([w_mean | w_logvar])
    bo_ref  : (1, 2*Z)      f32
    out_ref : (T*Bb, 2*Z)   f32    ([mean | logvar])
  """
  T, Bb, Hp = seq_len, b_blk, hp

  # ---- 1) Hoisted input projection: one dense MXU matmul for all steps. ----
  gx = jnp.dot(x_ref[...], wih_ref[...],
               preferred_element_type=jnp.float32) + b_ref[...]   # (T*Bb, 4Hp)

  whh = whh_ref[...]                                              # resident bf16

  # ---- 2) Recurrence: only h @ W_hh per step; statically unrolled. ---------
  # TODO(synk): for large T switch to lax.fori_loop(unroll=4-8) with first-axis
  # scratch staging; at T=8 a full static unroll keeps LLO visibility.
  h = jnp.zeros((Bb, Hp), jnp.float32)
  c = jnp.zeros((Bb, Hp), jnp.float32)
  hs = []
  for t in range(T):
    gates = gx[t * Bb:(t + 1) * Bb, :] + jnp.dot(
        h.astype(jnp.bfloat16), whh, preferred_element_type=jnp.float32)
    # PyTorch gate order i, f, g, o; every slice starts on a 128-lane boundary.
    # Padded lanes stay identically zero in c and h (preact 0 -> g=tanh(0)=0).
    i_g = jax.nn.sigmoid(gates[:, 0 * Hp:1 * Hp])
    f_g = jax.nn.sigmoid(gates[:, 1 * Hp:2 * Hp])
    g_g = jnp.tanh(gates[:, 2 * Hp:3 * Hp])
    o_g = jax.nn.sigmoid(gates[:, 3 * Hp:4 * Hp])
    c = f_g * c + i_g * g_g
    h = o_g * jnp.tanh(c)
    hs.append(h)

  # ---- 3) Trace-time staging + single fused head matmul. -------------------
  outs = jnp.concatenate(hs, axis=0).astype(jnp.bfloat16)         # (T*Bb, Hp)
  out_ref[...] = jnp.dot(outs, wo_ref[...],
                         preferred_element_type=jnp.float32) + bo_ref[...]


@functools.partial(jax.jit, static_argnames=("block_b",))
def lstm_encoder_forward(inputs, params, block_b=128):
  """inputs: (B, T, D_in) float32 (batch_first, like PyTorch).

  Returns (mean, logvar), each (B, T, Z) float32.
  """
  w_ih, w_hh, bias = params["w_ih"], params["w_hh"], params["bias"]
  w_out, b_out = params["w_out"], params["b_out"]

  B, T, D_in = inputs.shape
  Hp = w_hh.shape[0]
  Z2 = w_out.shape[1]

  # Batch grid: block_b sequences per grid step (pad B if needed).
  b_blk = min(B, block_b)
  b_pad = _round_up(B, b_blk)
  nb = b_pad // b_blk
  x = inputs
  if b_pad != B:
    x = jnp.pad(x, ((0, b_pad - B), (0, 0), (0, 0)))

  # One XLA transpose to per-block time-major rows: row r = t*b_blk + b.
  x_tm = (x.reshape(nb, b_blk, T, D_in)
            .transpose(0, 2, 1, 3)
            .reshape(nb * T * b_blk, D_in)
            .astype(jnp.bfloat16))

  rows = T * b_blk
  kernel = functools.partial(_lstm_encoder_kernel,
                             b_blk=b_blk, seq_len=T, hp=Hp)

  out2d = pl.pallas_call(
      kernel,
      out_shape=jax.ShapeDtypeStruct((nb * rows, Z2), jnp.float32),
      grid_spec=pltpu.PrefetchScalarGridSpec(
          num_scalar_prefetch=0,
          grid=(nb,),
          in_specs=[
              pl.BlockSpec((rows, D_in), lambda b: (b, 0)),
              pl.BlockSpec(w_ih.shape, lambda b: (0, 0)),
              pl.BlockSpec(w_hh.shape, lambda b: (0, 0)),
              pl.BlockSpec(bias.shape, lambda b: (0, 0)),
              pl.BlockSpec(w_out.shape, lambda b: (0, 0)),
              pl.BlockSpec(b_out.shape, lambda b: (0, 0)),
          ],
          out_specs=pl.BlockSpec((rows, Z2), lambda b: (b, 0)),
      ),
      compiler_params=pltpu.CompilerParams(
          dimension_semantics=("parallel",),          # v7x: shard across 2 TCs
          vmem_limit_bytes=32 * 1024 * 1024),         # budgeted for 64 MiB v7x
  )(x_tm, w_ih, w_hh, bias, w_out, b_out)

  out = (out2d.reshape(nb, T, b_blk, Z2)
              .transpose(0, 2, 1, 3)
              .reshape(b_pad, T, Z2)[:B])
  Z = Z2 // 2
  return out[..., :Z], out[..., Z:]


def init_params(key, input_size, hidden_size, z_size):
  """Deterministic synthetic parameters in PyTorch layout (f32)."""
  ks = jax.random.split(key, 8)
  s = 1.0 / np.sqrt(hidden_size)
  u = lambda k, shape: jax.random.uniform(k, shape, jnp.float32, -s, s)
  return {
      "w_ih": u(ks[0], (4 * hidden_size, input_size)),
      "w_hh": u(ks[1], (4 * hidden_size, hidden_size)),
      "b_ih": u(ks[2], (4 * hidden_size,)),
      "b_hh": u(ks[3], (4 * hidden_size,)),
      "w_mean": u(ks[4], (z_size, hidden_size)),
      "b_mean": u(ks[5], (z_size,)),
      "w_logvar": u(ks[6], (z_size, hidden_size)),
      "b_logvar": u(ks[7], (z_size,)),
  }


def pack_params(pt, hidden_size):
  """PyTorch-layout params -> kernel layout.

  Gate columns are zero-padded so each gate block starts on a 128-lane
  boundary; the two heads are fused into one (Hp, 2Z) weight; MXU operands are
  stored bf16, biases stay f32.
  """
  H = hidden_size
  Hp = _round_up(H, 128)
  w_ih = np.asarray(pt["w_ih"], np.float32)            # (4H, D)
  w_hh = np.asarray(pt["w_hh"], np.float32)            # (4H, H)
  bias = np.asarray(pt["b_ih"], np.float32) + np.asarray(pt["b_hh"], np.float32)
  D = w_ih.shape[1]

  w_ih_p = np.zeros((D, 4 * Hp), np.float32)
  w_hh_p = np.zeros((Hp, 4 * Hp), np.float32)
  b_p = np.zeros((1, 4 * Hp), np.float32)
  for k in range(4):
    w_ih_p[:, k * Hp:k * Hp + H] = w_ih[k * H:(k + 1) * H, :].T
    w_hh_p[:H, k * Hp:k * Hp + H] = w_hh[k * H:(k + 1) * H, :].T
    b_p[0, k * Hp:k * Hp + H] = bias[k * H:(k + 1) * H]

  w_mean = np.asarray(pt["w_mean"], np.float32)        # (Z, H)
  w_lv = np.asarray(pt["w_logvar"], np.float32)        # (Z, H)
  Z = w_mean.shape[0]
  w_out = np.zeros((Hp, 2 * Z), np.float32)
  w_out[:H, :Z] = w_mean.T
  w_out[:H, Z:] = w_lv.T
  b_out = np.concatenate([np.asarray(pt["b_mean"], np.float32),
                          np.asarray(pt["b_logvar"], np.float32)])[None, :]

  return {
      "w_ih": jnp.asarray(w_ih_p, jnp.bfloat16),       # (D, 4Hp)
      "w_hh": jnp.asarray(w_hh_p, jnp.bfloat16),       # (Hp, 4Hp)
      "bias": jnp.asarray(b_p, jnp.float32),           # (1, 4Hp)
      "w_out": jnp.asarray(w_out, jnp.bfloat16),       # (Hp, 2Z)
      "b_out": jnp.asarray(b_out, jnp.float32),        # (1, 2Z)
  }


def _reference_forward(inputs, pt):
  """Pure-JAX f32 reference (lax.scan LSTM) in PyTorch layout."""
  w_ih, w_hh = pt["w_ih"], pt["w_hh"]
  bias = pt["b_ih"] + pt["b_hh"]
  H = w_hh.shape[1]
  B = inputs.shape[0]

  def cell(carry, x_t):
    h, c = carry
    gates = x_t @ w_ih.T + h @ w_hh.T + bias
    i = jax.nn.sigmoid(gates[:, 0 * H:1 * H])
    f = jax.nn.sigmoid(gates[:, 1 * H:2 * H])
    g = jnp.tanh(gates[:, 2 * H:3 * H])
    o = jax.nn.sigmoid(gates[:, 3 * H:4 * H])
    c_new = f * c + i * g
    h_new = o * jnp.tanh(c_new)
    return (h_new, c_new), h_new

  x_tm = jnp.transpose(inputs, (1, 0, 2))
  init = (jnp.zeros((B, H), jnp.float32), jnp.zeros((B, H), jnp.float32))
  _, outs_tm = lax.scan(cell, init, x_tm)
  outs = jnp.transpose(outs_tm, (1, 0, 2))
  mean = outs @ pt["w_mean"].T + pt["b_mean"]
  logvar = outs @ pt["w_logvar"].T + pt["b_logvar"]
  return mean, logvar


if __name__ == "__main__":
  B, T = 2, 8
  INPUT_SIZE, HIDDEN_SIZE, Z_SIZE = 32, 32, 32

  key = jax.random.PRNGKey(0)
  k_in, k_par = jax.random.split(key)
  inputs = jax.random.normal(k_in, (B, T, INPUT_SIZE), jnp.float32)

  pt_params = init_params(k_par, INPUT_SIZE, HIDDEN_SIZE, Z_SIZE)
  kernel_params = pack_params(pt_params, HIDDEN_SIZE)

  # seq_len is only consumed by the ODE branch of the original module; the
  # non-ODE forward ignores it, so it is not an input here.
  mean, logvar = lstm_encoder_forward(inputs, kernel_params)
  jax.block_until_ready((mean, logvar))

  mean_ref, logvar_ref = _reference_forward(inputs, pt_params)
  # bf16 MXU operands (f32 accumulation / gate math) -> relaxed tolerance.
  np.testing.assert_allclose(np.asarray(mean), np.asarray(mean_ref),
                             rtol=3e-2, atol=3e-2)
  np.testing.assert_allclose(np.asarray(logvar), np.asarray(logvar_ref),
                             rtol=3e-2, atol=3e-2)

  assert mean.shape == (B, T, Z_SIZE) and logvar.shape == (B, T, Z_SIZE)
  print("KERNEL_OK")
</pallas_src>

<mosaic_0001>
module attributes {stable_mosaic.version = 11 : i64} {
  func.func @_lstm_encoder_kernel(%arg0: i32, %arg1: memref<16x32xbf16, #tpu.memory_space<vmem>>, %arg2: memref<32x512xbf16, #tpu.memory_space<vmem>>, %arg3: memref<128x512xbf16, #tpu.memory_space<vmem>>, %arg4: memref<1x512xf32, #tpu.memory_space<vmem>>, %arg5: memref<128x64xbf16, #tpu.memory_space<vmem>>, %arg6: memref<1x64xf32, #tpu.memory_space<vmem>>, %arg7: memref<16x64xf32, #tpu.memory_space<vmem>>) attributes {dimension_semantics = [#tpu.dimension_semantics<parallel>], iteration_bounds = array<i64: 1>, scalar_prefetch = 0 : i64, scratch_operands = 0 : i64, tpu.core_type = #tpu.core_type<tc>, window_params = [{transform_indices = @transform_0, window_bounds = array<i64: 16, 32>}, {pipeline_mode = #tpu.pipeline_mode<synchronous>, transform_indices = @transform_1, window_bounds = array<i64: 32, 512>}, {pipeline_mode = #tpu.pipeline_mode<synchronous>, transform_indices = @transform_2, window_bounds = array<i64: 128, 512>}, {pipeline_mode = #tpu.pipeline_mode<synchronous>, transform_indices = @transform_3, window_bounds = array<i64: 1, 512>}, {pipeline_mode = #tpu.pipeline_mode<synchronous>, transform_indices = @transform_4, window_bounds = array<i64: 128, 64>}, {pipeline_mode = #tpu.pipeline_mode<synchronous>, transform_indices = @transform_5, window_bounds = array<i64: 1, 64>}, {transform_indices = @transform_6, window_bounds = array<i64: 16, 64>}]} {
    %c0 = arith.constant 0 : index
    %c0_0 = arith.constant 0 : index
    %0 = vector.load %arg1[%c0, %c0_0] : memref<16x32xbf16, #tpu.memory_space<vmem>>, vector<16x32xbf16>
    %c0_1 = arith.constant 0 : index
    %c0_2 = arith.constant 0 : index
    %1 = vector.load %arg2[%c0_1, %c0_2] : memref<32x512xbf16, #tpu.memory_space<vmem>>, vector<32x512xbf16>
    %cst = arith.constant dense<0.000000e+00> : vector<16x512xf32>
    %2 = tpu.matmul %0, %1, %cst {dimension_numbers = #tpu.dot_dimension_numbers<[1], [0], [0], [1], [0, 0, 1, 1], [], []>} : vector<16x32xbf16>, vector<32x512xbf16>, vector<16x512xf32> -> vector<16x512xf32>
    %c0_3 = arith.constant 0 : index
    %c0_4 = arith.constant 0 : index
    %3 = vector.load %arg4[%c0_3, %c0_4] : memref<1x512xf32, #tpu.memory_space<vmem>>, vector<1x512xf32>
    %4 = vector.broadcast %3 : vector<1x512xf32> to vector<16x512xf32>
    %5 = arith.addf %2, %4 : vector<16x512xf32>
    %c0_5 = arith.constant 0 : index
    %c0_6 = arith.constant 0 : index
    %6 = vector.load %arg3[%c0_5, %c0_6] : memref<128x512xbf16, #tpu.memory_space<vmem>>, vector<128x512xbf16>
    %cst_7 = arith.constant 0.000000e+00 : f32
    %7 = vector.broadcast %cst_7 : f32 to vector<2x128xf32>
    %cst_8 = arith.constant 0.000000e+00 : f32
    %8 = vector.broadcast %cst_8 : f32 to vector<2x128xf32>
    %9 = vector.extract_strided_slice %5 {offsets = [0, 0], sizes = [2, 512], strides = [1, 1]} : vector<16x512xf32> to vector<2x512xf32>
    %10 = arith.truncf %7 : vector<2x128xf32> to vector<2x128xbf16>
    %cst_9 = arith.constant dense<0.000000e+00> : vector<2x512xf32>
    %11 = tpu.matmul %10, %6, %cst_9 {dimension_numbers = #tpu.dot_dimension_numbers<[1], [0], [0], [1], [0, 0, 1, 1], [], []>} : vector<2x128xbf16>, vector<128x512xbf16>, vector<2x512xf32> -> vector<2x512xf32>
    %12 = arith.addf %9, %11 : vector<2x512xf32>
    %13 = vector.extract_strided_slice %12 {offsets = [0, 0], sizes = [2, 128], strides = [1, 1]} : vector<2x512xf32> to vector<2x128xf32>
    %14 = arith.negf %13 : vector<2x128xf32>
    %15 = math.exp %14 : vector<2x128xf32>
    %cst_10 = arith.constant 1.000000e+00 : f32
    %16 = vector.broadcast %cst_10 : f32 to vector<2x128xf32>
    %17 = arith.addf %16, %15 : vector<2x128xf32>
    %18 = arith.divf %16, %17 : vector<2x128xf32>
    %19 = vector.extract_strided_slice %12 {offsets = [0, 128], sizes = [2, 128], strides = [1, 1]} : vector<2x512xf32> to vector<2x128xf32>
    %20 = arith.negf %19 : vector<2x128xf32>
    %21 = math.exp %20 : vector<2x128xf32>
    %cst_11 = arith.constant 1.000000e+00 : f32
    %22 = vector.broadcast %cst_11 : f32 to vector<2x128xf32>
    %23 = arith.addf %22, %21 : vector<2x128xf32>
    %24 = arith.divf %22, %23 : vector<2x128xf32>
    %25 = vector.extract_strided_slice %12 {offsets = [0, 256], sizes = [2, 128], strides = [1, 1]} : vector<2x512xf32> to vector<2x128xf32>
    %26 = math.tanh %25 : vector<2x128xf32>
    %27 = vector.extract_strided_slice %12 {offsets = [0, 384], sizes = [2, 128], strides = [1, 1]} : vector<2x512xf32> to vector<2x128xf32>
    %28 = arith.negf %27 : vector<2x128xf32>
    %29 = math.exp %28 : vector<2x128xf32>
    %cst_12 = arith.constant 1.000000e+00 : f32
    %30 = vector.broadcast %cst_12 : f32 to vector<2x128xf32>
    %31 = arith.addf %30, %29 : vector<2x128xf32>
    %32 = arith.divf %30, %31 : vector<2x128xf32>
    %33 = arith.mulf %24, %8 : vector<2x128xf32>
    %34 = arith.mulf %18, %26 : vector<2x128xf32>
    %35 = arith.addf %33, %34 : vector<2x128xf32>
    %36 = math.tanh %35 : vector<2x128xf32>
    %37 = arith.mulf %32, %36 : vector<2x128xf32>
    %38 = vector.extract_strided_slice %5 {offsets = [2, 0], sizes = [2, 512], strides = [1, 1]} : vector<16x512xf32> to vector<2x512xf32>
    %39 = arith.truncf %37 : vector<2x128xf32> to vector<2x128xbf16>
    %cst_13 = arith.constant dense<0.000000e+00> : vector<2x512xf32>
    %40 = tpu.matmul %39, %6, %cst_13 {dimension_numbers = #tpu.dot_dimension_numbers<[1], [0], [0], [1], [0, 0, 1, 1], [], []>} : vector<2x128xbf16>, vector<128x512xbf16>, vector<2x512xf32> -> vector<2x512xf32>
    %41 = arith.addf %38, %40 : vector<2x512xf32>
    %42 = vector.extract_strided_slice %41 {offsets = [0, 0], sizes = [2, 128], strides = [1, 1]} : vector<2x512xf32> to vector<2x128xf32>
    %43 = arith.negf %42 : vector<2x128xf32>
    %44 = math.exp %43 : vector<2x128xf32>
    %cst_14 = arith.constant 1.000000e+00 : f32
    %45 = vector.broadcast %cst_14 : f32 to vector<2x128xf32>
    %46 = arith.addf %45, %44 : vector<2x128xf32>
    %47 = arith.divf %45, %46 : vector<2x128xf32>
    %48 = vector.extract_strided_slice %41 {offsets = [0, 128], sizes = [2, 128], strides = [1, 1]} : vector<2x512xf32> to vector<2x128xf32>
    %49 = arith.negf %48 : vector<2x128xf32>
    %50 = math.exp %49 : vector<2x128xf32>
    %cst_15 = arith.constant 1.000000e+00 : f32
    %51 = vector.broadcast %cst_15 : f32 to vector<2x128xf32>
    %52 = arith.addf %51, %50 : vector<2x128xf32>
    %53 = arith.divf %51, %52 : vector<2x128xf32>
    %54 = vector.extract_strided_slice %41 {offsets = [0, 256], sizes = [2, 128], strides = [1, 1]} : vector<2x512xf32> to vector<2x128xf32>
    %55 = math.tanh %54 : vector<2x128xf32>
    %56 = vector.extract_strided_slice %41 {offsets = [0, 384], sizes = [2, 128], strides = [1, 1]} : vector<2x512xf32> to vector<2x128xf32>
    %57 = arith.negf %56 : vector<2x128xf32>
    %58 = math.exp %57 : vector<2x128xf32>
    %cst_16 = arith.constant 1.000000e+00 : f32
    %59 = vector.broadcast %cst_16 : f32 to vector<2x128xf32>
    %60 = arith.addf %59, %58 : vector<2x128xf32>
    %61 = arith.divf %59, %60 : vector<2x128xf32>
    %62 = arith.mulf %53, %35 : vector<2x128xf32>
    %63 = arith.mulf %47, %55 : vector<2x128xf32>
    %64 = arith.addf %62, %63 : vector<2x128xf32>
    %65 = math.tanh %64 : vector<2x128xf32>
    %66 = arith.mulf %61, %65 : vector<2x128xf32>
    %67 = vector.extract_strided_slice %5 {offsets = [4, 0], sizes = [2, 512], strides = [1, 1]} : vector<16x512xf32> to vector<2x512xf32>
    %68 = arith.truncf %66 : vector<2x128xf32> to vector<2x128xbf16>
    %cst_17 = arith.constant dense<0.000000e+00> : vector<2x512xf32>
    %69 = tpu.matmul %68, %6, %cst_17 {dimension_numbers = #tpu.dot_dimension_numbers<[1], [0], [0], [1], [0, 0, 1, 1], [], []>} : vector<2x128xbf16>, vector<128x512xbf16>, vector<2x512xf32> -> vector<2x512xf32>
    %70 = arith.addf %67, %69 : vector<2x512xf32>
    %71 = vector.extract_strided_slice %70 {offsets = [0, 0], sizes = [2, 128], strides = [1, 1]} : vector<2x512xf32> to vector<2x128xf32>
    %72 = arith.negf %71 : vector<2x128xf32>
    %73 = math.exp %72 : vector<2x128xf32>
    %cst_18 = arith.constant 1.000000e+00 : f32
    %74 = vector.broadcast %cst_18 : f32 to vector<2x128xf32>
    %75 = arith.addf %74, %73 : vector<2x128xf32>
    %76 = arith.divf %74, %75 : vector<2x128xf32>
    %77 = vector.extract_strided_slice %70 {offsets = [0, 128], sizes = [2, 128], strides = [1, 1]} : vector<2x512xf32> to vector<2x128xf32>
    %78 = arith.negf %77 : vector<2x128xf32>
    %79 = math.exp %78 : vector<2x128xf32>
    %cst_19 = arith.constant 1.000000e+00 : f32
    %80 = vector.broadcast %cst_19 : f32 to vector<2x128xf32>
    %81 = arith.addf %80, %79 : vector<2x128xf32>
    %82 = arith.divf %80, %81 : vector<2x128xf32>
    %83 = vector.extract_strided_slice %70 {offsets = [0, 256], sizes = [2, 128], strides = [1, 1]} : vector<2x512xf32> to vector<2x128xf32>
    %84 = math.tanh %83 : vector<2x128xf32>
    %85 = vector.extract_strided_slice %70 {offsets = [0, 384], sizes = [2, 128], strides = [1, 1]} : vector<2x512xf32> to vector<2x128xf32>
    %86 = arith.negf %85 : vector<2x128xf32>
    %87 = math.exp %86 : vector<2x128xf32>
    %cst_20 = arith.constant 1.000000e+00 : f32
    %88 = vector.broadcast %cst_20 : f32 to vector<2x128xf32>
    %89 = arith.addf %88, %87 : vector<2x128xf32>
    %90 = arith.divf %88, %89 : vector<2x128xf32>
    %91 = arith.mulf %82, %64 : vector<2x128xf32>
    %92 = arith.mulf %76, %84 : vector<2x128xf32>
    %93 = arith.addf %91, %92 : vector<2x128xf32>
    %94 = math.tanh %93 : vector<2x128xf32>
    %95 = arith.mulf %90, %94 : vector<2x128xf32>
    %96 = vector.extract_strided_slice %5 {offsets = [6, 0], sizes = [2, 512], strides = [1, 1]} : vector<16x512xf32> to vector<2x512xf32>
    %97 = arith.truncf %95 : vector<2x128xf32> to vector<2x128xbf16>
    %cst_21 = arith.constant dense<0.000000e+00> : vector<2x512xf32>
    %98 = tpu.matmul %97, %6, %cst_21 {dimension_numbers = #tpu.dot_dimension_numbers<[1], [0], [0], [1], [0, 0, 1, 1], [], []>} : vector<2x128xbf16>, vector<128x512xbf16>, vector<2x512xf32> -> vector<2x512xf32>
    %99 = arith.addf %96, %98 : vector<2x512xf32>
    %100 = vector.extract_strided_slice %99 {offsets = [0, 0], sizes = [2, 128], strides = [1, 1]} : vector<2x512xf32> to vector<2x128xf32>
    %101 = arith.negf %100 : vector<2x128xf32>
    %102 = math.exp %101 : vector<2x128xf32>
    %cst_22 = arith.constant 1.000000e+00 : f32
    %103 = vector.broadcast %cst_22 : f32 to vector<2x128xf32>
    %104 = arith.addf %103, %102 : vector<2x128xf32>
    %105 = arith.divf %103, %104 : vector<2x128xf32>
    %106 = vector.extract_strided_slice %99 {offsets = [0, 128], sizes = [2, 128], strides = [1, 1]} : vector<2x512xf32> to vector<2x128xf32>
    %107 = arith.negf %106 : vector<2x128xf32>
    %108 = math.exp %107 : vector<2x128xf32>
    %cst_23 = arith.constant 1.000000e+00 : f32
    %109 = vector.broadcast %cst_23 : f32 to vector<2x128xf32>
    %110 = arith.addf %109, %108 : vector<2x128xf32>
    %111 = arith.divf %109, %110 : vector<2x128xf32>
    %112 = vector.extract_strided_slice %99 {offsets = [0, 256], sizes = [2, 128], strides = [1, 1]} : vector<2x512xf32> to vector<2x128xf32>
    %113 = math.tanh %112 : vector<2x128xf32>
    %114 = vector.extract_strided_slice %99 {offsets = [0, 384], sizes = [2, 128], strides = [1, 1]} : vector<2x512xf32> to vector<2x128xf32>
    %115 = arith.negf %114 : vector<2x128xf32>
    %116 = math.exp %115 : vector<2x128xf32>
    %cst_24 = arith.constant 1.000000e+00 : f32
    %117 = vector.broadcast %cst_24 : f32 to vector<2x128xf32>
    %118 = arith.addf %117, %116 : vector<2x128xf32>
    %119 = arith.divf %117, %118 : vector<2x128xf32>
    %120 = arith.mulf %111, %93 : vector<2x128xf32>
    %121 = arith.mulf %105, %113 : vector<2x128xf32>
    %122 = arith.addf %120, %121 : vector<2x128xf32>
    %123 = math.tanh %122 : vector<2x128xf32>
    %124 = arith.mulf %119, %123 : vector<2x128xf32>
    %125 = vector.extract_strided_slice %5 {offsets = [8, 0], sizes = [2, 512], strides = [1, 1]} : vector<16x512xf32> to vector<2x512xf32>
    %126 = arith.truncf %124 : vector<2x128xf32> to vector<2x128xbf16>
    %cst_25 = arith.constant dense<0.000000e+00> : vector<2x512xf32>
    %127 = tpu.matmul %126, %6, %cst_25 {dimension_numbers = #tpu.dot_dimension_numbers<[1], [0], [0], [1], [0, 0, 1, 1], [], []>} : vector<2x128xbf16>, vector<128x512xbf16>, vector<2x512xf32> -> vector<2x512xf32>
    %128 = arith.addf %125, %127 : vector<2x512xf32>
    %129 = vector.extract_strided_slice %128 {offsets = [0, 0], sizes = [2, 128], strides = [1, 1]} : vector<2x512xf32> to vector<2x128xf32>
    %130 = arith.negf %129 : vector<2x128xf32>
    %131 = math.exp %130 : vector<2x128xf32>
    %cst_26 = arith.constant 1.000000e+00 : f32
    %132 = vector.broadcast %cst_26 : f32 to vector<2x128xf32>
    %133 = arith.addf %132, %131 : vector<2x128xf32>
    %134 = arith.divf %132, %133 : vector<2x128xf32>
    %135 = vector.extract_strided_slice %128 {offsets = [0, 128], sizes = [2, 128], strides = [1, 1]} : vector<2x512xf32> to vector<2x128xf32>
    %136 = arith.negf %135 : vector<2x128xf32>
    %137 = math.exp %136 : vector<2x128xf32>
    %cst_27 = arith.constant 1.000000e+00 : f32
    %138 = vector.broadcast %cst_27 : f32 to vector<2x128xf32>
    %139 = arith.addf %138, %137 : vector<2x128xf32>
    %140 = arith.divf %138, %139 : vector<2x128xf32>
    %141 = vector.extract_strided_slice %128 {offsets = [0, 256], sizes = [2, 128], strides = [1, 1]} : vector<2x512xf32> to vector<2x128xf32>
    %142 = math.tanh %141 : vector<2x128xf32>
    %143 = vector.extract_strided_slice %128 {offsets = [0, 384], sizes = [2, 128], strides = [1, 1]} : vector<2x512xf32> to vector<2x128xf32>
    %144 = arith.negf %143 : vector<2x128xf32>
    %145 = math.exp %144 : vector<2x128xf32>
    %cst_28 = arith.constant 1.000000e+00 : f32
    %146 = vector.broadcast %cst_28 : f32 to vector<2x128xf32>
    %147 = arith.addf %146, %145 : vector<2x128xf32>
    %148 = arith.divf %146, %147 : vector<2x128xf32>
    %149 = arith.mulf %140, %122 : vector<2x128xf32>
    %150 = arith.mulf %134, %142 : vector<2x128xf32>
    %151 = arith.addf %149, %150 : vector<2x128xf32>
    %152 = math.tanh %151 : vector<2x128xf32>
    %153 = arith.mulf %148, %152 : vector<2x128xf32>
    %154 = vector.extract_strided_slice %5 {offsets = [10, 0], sizes = [2, 512], strides = [1, 1]} : vector<16x512xf32> to vector<2x512xf32>
    %155 = arith.truncf %153 : vector<2x128xf32> to vector<2x128xbf16>
    %cst_29 = arith.constant dense<0.000000e+00> : vector<2x512xf32>
    %156 = tpu.matmul %155, %6, %cst_29 {dimension_numbers = #tpu.dot_dimension_numbers<[1], [0], [0], [1], [0, 0, 1, 1], [], []>} : vector<2x128xbf16>, vector<128x512xbf16>, vector<2x512xf32> -> vector<2x512xf32>
    %157 = arith.addf %154, %156 : vector<2x512xf32>
    %158 = vector.extract_strided_slice %157 {offsets = [0, 0], sizes = [2, 128], strides = [1, 1]} : vector<2x512xf32> to vector<2x128xf32>
    %159 = arith.negf %158 : vector<2x128xf32>
    %160 = math.exp %159 : vector<2x128xf32>
    %cst_30 = arith.constant 1.000000e+00 : f32
    %161 = vector.broadcast %cst_30 : f32 to vector<2x128xf32>
    %162 = arith.addf %161, %160 : vector<2x128xf32>
    %163 = arith.divf %161, %162 : vector<2x128xf32>
    %164 = vector.extract_strided_slice %157 {offsets = [0, 128], sizes = [2, 128], strides = [1, 1]} : vector<2x512xf32> to vector<2x128xf32>
    %165 = arith.negf %164 : vector<2x128xf32>
    %166 = math.exp %165 : vector<2x128xf32>
    %cst_31 = arith.constant 1.000000e+00 : f32
    %167 = vector.broadcast %cst_31 : f32 to vector<2x128xf32>
    %168 = arith.addf %167, %166 : vector<2x128xf32>
    %169 = arith.divf %167, %168 : vector<2x128xf32>
    %170 = vector.extract_strided_slice %157 {offsets = [0, 256], sizes = [2, 128], strides = [1, 1]} : vector<2x512xf32> to vector<2x128xf32>
    %171 = math.tanh %170 : vector<2x128xf32>
    %172 = vector.extract_strided_slice %157 {offsets = [0, 384], sizes = [2, 128], strides = [1, 1]} : vector<2x512xf32> to vector<2x128xf32>
    %173 = arith.negf %172 : vector<2x128xf32>
    %174 = math.exp %173 : vector<2x128xf32>
    %cst_32 = arith.constant 1.000000e+00 : f32
    %175 = vector.broadcast %cst_32 : f32 to vector<2x128xf32>
    %176 = arith.addf %175, %174 : vector<2x128xf32>
    %177 = arith.divf %175, %176 : vector<2x128xf32>
    %178 = arith.mulf %169, %151 : vector<2x128xf32>
    %179 = arith.mulf %163, %171 : vector<2x128xf32>
    %180 = arith.addf %178, %179 : vector<2x128xf32>
    %181 = math.tanh %180 : vector<2x128xf32>
    %182 = arith.mulf %177, %181 : vector<2x128xf32>
    %183 = vector.extract_strided_slice %5 {offsets = [12, 0], sizes = [2, 512], strides = [1, 1]} : vector<16x512xf32> to vector<2x512xf32>
    %184 = arith.truncf %182 : vector<2x128xf32> to vector<2x128xbf16>
    %cst_33 = arith.constant dense<0.000000e+00> : vector<2x512xf32>
    %185 = tpu.matmul %184, %6, %cst_33 {dimension_numbers = #tpu.dot_dimension_numbers<[1], [0], [0], [1], [0, 0, 1, 1], [], []>} : vector<2x128xbf16>, vector<128x512xbf16>, vector<2x512xf32> -> vector<2x512xf32>
    %186 = arith.addf %183, %185 : vector<2x512xf32>
    %187 = vector.extract_strided_slice %186 {offsets = [0, 0], sizes = [2, 128], strides = [1, 1]} : vector<2x512xf32> to vector<2x128xf32>
    %188 = arith.negf %187 : vector<2x128xf32>
    %189 = math.exp %188 : vector<2x128xf32>
    %cst_34 = arith.constant 1.000000e+00 : f32
    %190 = vector.broadcast %cst_34 : f32 to vector<2x128xf32>
    %191 = arith.addf %190, %189 : vector<2x128xf32>
    %192 = arith.divf %190, %191 : vector<2x128xf32>
    %193 = vector.extract_strided_slice %186 {offsets = [0, 128], sizes = [2, 128], strides = [1, 1]} : vector<2x512xf32> to vector<2x128xf32>
    %194 = arith.negf %193 : vector<2x128xf32>
    %195 = math.exp %194 : vector<2x128xf32>
    %cst_35 = arith.constant 1.000000e+00 : f32
    %196 = vector.broadcast %cst_35 : f32 to vector<2x128xf32>
    %197 = arith.addf %196, %195 : vector<2x128xf32>
    %198 = arith.divf %196, %197 : vector<2x128xf32>
    %199 = vector.extract_strided_slice %186 {offsets = [0, 256], sizes = [2, 128], strides = [1, 1]} : vector<2x512xf32> to vector<2x128xf32>
    %200 = math.tanh %199 : vector<2x128xf32>
    %201 = vector.extract_strided_slice %186 {offsets = [0, 384], sizes = [2, 128], strides = [1, 1]} : vector<2x512xf32> to vector<2x128xf32>
    %202 = arith.negf %201 : vector<2x128xf32>
    %203 = math.exp %202 : vector<2x128xf32>
    %cst_36 = arith.constant 1.000000e+00 : f32
    %204 = vector.broadcast %cst_36 : f32 to vector<2x128xf32>
    %205 = arith.addf %204, %203 : vector<2x128xf32>
    %206 = arith.divf %204, %205 : vector<2x128xf32>
    %207 = arith.mulf %198, %180 : vector<2x128xf32>
    %208 = arith.mulf %192, %200 : vector<2x128xf32>
    %209 = arith.addf %207, %208 : vector<2x128xf32>
    %210 = math.tanh %209 : vector<2x128xf32>
    %211 = arith.mulf %206, %210 : vector<2x128xf32>
    %212 = vector.extract_strided_slice %5 {offsets = [14, 0], sizes = [2, 512], strides = [1, 1]} : vector<16x512xf32> to vector<2x512xf32>
    %213 = arith.truncf %211 : vector<2x128xf32> to vector<2x128xbf16>
    %cst_37 = arith.constant dense<0.000000e+00> : vector<2x512xf32>
    %214 = tpu.matmul %213, %6, %cst_37 {dimension_numbers = #tpu.dot_dimension_numbers<[1], [0], [0], [1], [0, 0, 1, 1], [], []>} : vector<2x128xbf16>, vector<128x512xbf16>, vector<2x512xf32> -> vector<2x512xf32>
    %215 = arith.addf %212, %214 : vector<2x512xf32>
    %216 = vector.extract_strided_slice %215 {offsets = [0, 0], sizes = [2, 128], strides = [1, 1]} : vector<2x512xf32> to vector<2x128xf32>
    %217 = arith.negf %216 : vector<2x128xf32>
    %218 = math.exp %217 : vector<2x128xf32>
    %cst_38 = arith.constant 1.000000e+00 : f32
    %219 = vector.broadcast %cst_38 : f32 to vector<2x128xf32>
    %220 = arith.addf %219, %218 : vector<2x128xf32>
    %221 = arith.divf %219, %220 : vector<2x128xf32>
    %222 = vector.extract_strided_slice %215 {offsets = [0, 128], sizes = [2, 128], strides = [1, 1]} : vector<2x512xf32> to vector<2x128xf32>
    %223 = arith.negf %222 : vector<2x128xf32>
    %224 = math.exp %223 : vector<2x128xf32>
    %cst_39 = arith.constant 1.000000e+00 : f32
    %225 = vector.broadcast %cst_39 : f32 to vector<2x128xf32>
    %226 = arith.addf %225, %224 : vector<2x128xf32>
    %227 = arith.divf %225, %226 : vector<2x128xf32>
    %228 = vector.extract_strided_slice %215 {offsets = [0, 256], sizes = [2, 128], strides = [1, 1]} : vector<2x512xf32> to vector<2x128xf32>
    %229 = math.tanh %228 : vector<2x128xf32>
    %230 = vector.extract_strided_slice %215 {offsets = [0, 384], sizes = [2, 128], strides = [1, 1]} : vector<2x512xf32> to vector<2x128xf32>
    %231 = arith.negf %230 : vector<2x128xf32>
    %232 = math.exp %231 : vector<2x128xf32>
    %cst_40 = arith.constant 1.000000e+00 : f32
    %233 = vector.broadcast %cst_40 : f32 to vector<2x128xf32>
    %234 = arith.addf %233, %232 : vector<2x128xf32>
    %235 = arith.divf %233, %234 : vector<2x128xf32>
    %236 = arith.mulf %227, %209 : vector<2x128xf32>
    %237 = arith.mulf %221, %229 : vector<2x128xf32>
    %238 = arith.addf %236, %237 : vector<2x128xf32>
    %239 = math.tanh %238 : vector<2x128xf32>
    %240 = arith.mulf %235, %239 : vector<2x128xf32>
    %241 = tpu.concatenate %37, %66, %95, %124, %153, %182, %211, %240 in 0 : vector<2x128xf32>, vector<2x128xf32>, vector<2x128xf32>, vector<2x128xf32>, vector<2x128xf32>, vector<2x128xf32>, vector<2x128xf32>, vector<2x128xf32> -> vector<16x128xf32>
    %242 = arith.truncf %241 : vector<16x128xf32> to vector<16x128xbf16>
    %c0_41 = arith.constant 0 : index
    %c0_42 = arith.constant 0 : index
    %243 = vector.load %arg5[%c0_41, %c0_42] : memref<128x64xbf16, #tpu.memory_space<vmem>>, vector<128x64xbf16>
    %cst_43 = arith.constant dense<0.000000e+00> : vector<16x64xf32>
    %244 = tpu.matmul %242, %243, %cst_43 {dimension_numbers = #tpu.dot_dimension_numbers<[1], [0], [0], [1], [0, 0, 1, 1], [], []>} : vector<16x128xbf16>, vector<128x64xbf16>, vector<16x64xf32> -> vector<16x64xf32>
    %c0_44 = arith.constant 0 : index
    %c0_45 = arith.constant 0 : index
    %245 = vector.load %arg6[%c0_44, %c0_45] : memref<1x64xf32, #tpu.memory_space<vmem>>, vector<1x64xf32>
    %246 = vector.broadcast %245 : vector<1x64xf32> to vector<16x64xf32>
    %247 = arith.addf %244, %246 : vector<16x64xf32>
    %c0_46 = arith.constant 0 : index
    %c0_47 = arith.constant 0 : index
    %248 = vector.load %arg7[%c0_46, %c0_47] : memref<16x64xf32, #tpu.memory_space<vmem>>, vector<16x64xf32>
    tpu.vector_store %arg7[%c0_46, %c0_47], %247 {strides = array<i32>} : memref<16x64xf32, #tpu.memory_space<vmem>>, vector<16x64xf32>,
    return
  }
  func.func @transform_0(%arg0: i32) -> (i32, i32) {
    %c0_i32 = arith.constant 0 : i32
    %c0_i32_0 = arith.constant 0 : i32
    return %arg0, %c0_i32 : i32, i32
  }
  func.func @transform_1(%arg0: i32) -> (i32, i32) {
    %c0_i32 = arith.constant 0 : i32
    %c0_i32_0 = arith.constant 0 : i32
    %c0_i32_1 = arith.constant 0 : i32
    return %c0_i32, %c0_i32_0 : i32, i32
  }
  func.func @transform_2(%arg0: i32) -> (i32, i32) {
    %c0_i32 = arith.constant 0 : i32
    %c0_i32_0 = arith.constant 0 : i32
    %c0_i32_1 = arith.constant 0 : i32
    return %c0_i32, %c0_i32_0 : i32, i32
  }
  func.func @transform_3(%arg0: i32) -> (i32, i32) {
    %c0_i32 = arith.constant 0 : i32
    %c0_i32_0 = arith.constant 0 : i32
    %c0_i32_1 = arith.constant 0 : i32
    return %c0_i32, %c0_i32_0 : i32, i32
  }
  func.func @transform_4(%arg0: i32) -> (i32, i32) {
    %c0_i32 = arith.constant 0 : i32
    %c0_i32_0 = arith.constant 0 : i32
    %c0_i32_1 = arith.constant 0 : i32
    return %c0_i32, %c0_i32_0 : i32, i32
  }
  func.func @transform_5(%arg0: i32) -> (i32, i32) {
    %c0_i32 = arith.constant 0 : i32
    %c0_i32_0 = arith.constant 0 : i32
    %c0_i32_1 = arith.constant 0 : i32
    return %c0_i32, %c0_i32_0 : i32, i32
  }
  func.func @transform_6(%arg0: i32) -> (i32, i32) {
    %c0_i32 = arith.constant 0 : i32
    %c0_i32_0 = arith.constant 0 : i32
    return %arg0, %c0_i32 : i32, i32
  }
}

</mosaic_0001>

<llo_original>
// kernel: lstm_encoder_forward.1
$region0: #{lstm_encoder_forward.1}
  #allocation0 [shape = 'u32[]', space=smem, size = 0x4, offset = 0x4, fixed_abs, tag = 'smem constant byte address 0x4 - core index']
  #allocation1 [shape = 'u32[144,128]{1,0:T(1,128)}', space=vmem, size = 0x12000, scoped, tag = 'internal scratch']
  %s0 = inlined_call_operand.vmem [shape: bf16[16,32], index: 0, kind: input, shape index: {}]
  %s1 = inlined_call_operand.vmem [shape: bf16[32,512], index: 1, kind: input, shape index: {}]
  %s2 = inlined_call_operand.hbm [shape: bf16[128,512], index: 2, kind: input, shape index: {}]
  %s3 = inlined_call_operand.vmem [shape: f32[1,512], index: 3, kind: input, shape index: {}]
  %s4 = inlined_call_operand.vmem [shape: bf16[128,64], index: 4, kind: input, shape index: {}]
  %s5 = inlined_call_operand.vmem [shape: f32[1,64], index: 5, kind: input, shape index: {}]
  %s6 = inlined_call_operand.vmem [shape: f32[16,64], index: 6, kind: output, shape index: {}]
  %s7 = sld [smem:[#allocation0]]
  $region38: #{lstm_encoder_forward.1} parent=0
    _
  %s9 = ssub.s32 1, %s7
  %s10 = scalar_select 0, %s9, %s7
  $region1: #{lstm_encoder_forward.1} parent=0
    #allocation2 [shape = 'u8[131072]{0}', space=vmem, size = 0x20000, scoped, tag = 'input window, operand 2, single buffered']
    #allocation3 [shape = 's32[1]{0}', space=sflag, size = 0x4, scoped, tag = 'scoped memory for lstm_encoder_forward.1']
    %11 = vsyncpa [#allocation3], 0
    // Predicated region
    $region2: #{lstm_encoder_forward.1} parent=1 // pred_check
      _
    $region3: #{lstm_encoder_forward.1} parent=1 // pred_check_branch
      %13 = sbr.rel (0) target = $region5
    $region4: #{lstm_encoder_forward.1} parent=1 // pred_region
      _
    $region5: #{lstm_encoder_forward.1} parent=1 // pred_fallthru
      _
    // Predicated region
    $region6: #{lstm_encoder_forward.1} parent=1 // pred_check
      _
    $region7: #{lstm_encoder_forward.1} parent=1 // pred_check_branch
      %15 = sbr.rel (0) target = $region9
    $region8: #{lstm_encoder_forward.1} parent=1 // pred_region
      _
    $region9: #{lstm_encoder_forward.1} parent=1 // pred_fallthru
      _
    // Predicated region
    $region10: #{lstm_encoder_forward.1} parent=1 // pred_check
      _
    $region11: #{lstm_encoder_forward.1} parent=1 // pred_check_branch
      %17 = sbr.rel (0) target = $region13
    $region12: #{lstm_encoder_forward.1} parent=1 // pred_region
      %s19 = ssub.s32 4096, 4096
      %20 = vsyncadd [#allocation3], %s19
      %s21 = sshll.u32 [#allocation2], 4
      %s22 = int_to_ptr.vmem [resolvable:$true] %s21
      %27 = dma.hbm_to_vmem [thread:$0]  %s2, 4096, %s22, [#allocation3], 256, 256, 16
    $region13: #{lstm_encoder_forward.1} parent=1 // pred_fallthru
      _
    // Predicated region
    $region14: #{lstm_encoder_forward.1} parent=1 // pred_check
      _
    $region15: #{lstm_encoder_forward.1} parent=1 // pred_check_branch
      %29 = sbr.rel (0) target = $region17
    $region16: #{lstm_encoder_forward.1} parent=1 // pred_region
      _
    $region17: #{lstm_encoder_forward.1} parent=1 // pred_fallthru
      _
    // Predicated region
    $region18: #{lstm_encoder_forward.1} parent=1 // pred_check
      _
    $region19: #{lstm_encoder_forward.1} parent=1 // pred_check_branch
      %31 = sbr.rel (0) target = $region21
    $region20: #{lstm_encoder_forward.1} parent=1 // pred_region
      _
    $region21: #{lstm_encoder_forward.1} parent=1 // pred_fallthru
      _
    // Predicated region
    $region22: #{lstm_encoder_forward.1} parent=1 // pred_check
      _
    $region23: #{lstm_encoder_forward.1} parent=1 // pred_check_branch
      %33 = sbr.rel (0) target = $region25
    $region24: #{lstm_encoder_forward.1} parent=1 // pred_region
      _
    $region25: #{lstm_encoder_forward.1} parent=1 // pred_fallthru
      _
    // Predicated region
    $region26: #{lstm_encoder_forward.1} parent=1 // pred_check
      _
    $region27: #{lstm_encoder_forward.1} parent=1 // pred_check_branch
      %35 = sbr.rel (0) target = $region29
    $region28: #{lstm_encoder_forward.1} parent=1 // pred_region
      %36 = dma.done [#allocation3], 4096
    $region29: #{lstm_encoder_forward.1} parent=1 // pred_fallthru
      _
    %v38 = vld [vmem:[%s0] sm:$0xf]
    %v39 = vld [vmem:[%s0 + $0x4] sm:$0xf]
    %v40 = vld [vmem:[%s1] sm:$0xff]
    %v41 = vld [vmem:[%s1 + $0x8] sm:$0xff]
    %v42 = vld [vmem:[%s1 + $0x10] sm:$0xff]
    %v43 = vld [vmem:[%s1 + $0x18] sm:$0xff]
    %v44 = vld [vmem:[%s1 + $0x20] sm:$0xff]
    %v45 = vld [vmem:[%s1 + $0x28] sm:$0xff]
    %v46 = vld [vmem:[%s1 + $0x30] sm:$0xff]
    %v47 = vld [vmem:[%s1 + $0x38] sm:$0xff]
    %v48 = vld [vmem:[%s3] sm:$0xf]
    %v50 = vlaneseq
    %v51 = vshrl.u32 %v50, 7
    %v52 = vsub.s32 0, %v51
    %v53 = vrot.slane %v48, %v52
    %v54 = vlaneseq
    %v55 = vshrl.u32 %v54, 7
    %v56 = vsub.s32 1, %v55
    %v57 = vrot.slane %v48, %v56
    %v58 = vlaneseq
    %v59 = vshrl.u32 %v58, 7
    %v60 = vsub.s32 2, %v59
    %v61 = vrot.slane %v48, %v60
    %v62 = vlaneseq
    %v63 = vshrl.u32 %v62, 7
    %v64 = vsub.s32 3, %v63
    %v65 = vrot.slane %v48, %v64
    %v72 = vunpack.c.l.b16 %v38
    %v73 = vunpack.c.l.b16 %v39
    %v74 = vpack.c.b16 %v73, %v72
    %v83 = vunpack.c.l.b16 %v40
    %v84 = vunpack.c.h.b16 %v40
    %v85 = vunpack.c.l.b16 %v41
    %v86 = vunpack.c.h.b16 %v41
    %v87 = vunpack.c.l.b16 %v42
    %v88 = vunpack.c.h.b16 %v42
    %v89 = vunpack.c.l.b16 %v43
    %v90 = vunpack.c.h.b16 %v43
    %v91 = vunpack.c.l.b16 %v44
    %v92 = vunpack.c.h.b16 %v44
    %v93 = vunpack.c.l.b16 %v45
    %v94 = vunpack.c.h.b16 %v45
    %v95 = vunpack.c.l.b16 %v46
    %v96 = vunpack.c.h.b16 %v46
    %v97 = vunpack.c.l.b16 %v47
    %v98 = vunpack.c.h.b16 %v47
    %v99 = vpack.c.b16 %v87, %v83
    %v100 = vpack.c.b16 %v88, %v84
    %v101 = vpack.c.b16 %v89, %v85
    %v102 = vpack.c.b16 %v90, %v86
    %v103 = vpack.c.b16 %v95, %v91
    %v104 = vpack.c.b16 %v96, %v92
    %v105 = vpack.c.b16 %v97, %v93
    %v106 = vpack.c.b16 %v98, %v94
    %vm115 = vcmask 261120
    %v117 = vsel %vm115, %v74, 0
    %119 = vmatprep.subr.bf16.mxu0 %v100
    %120 = vmatpush1.bf16.msra.mxu0 %v99
    %121 = vmatprep.subr.bf16.mxu0 %v104
    %122 = vmatpush1.bf16.msra.mxu0 %v103
    %123 = vmatprep.subr.bf16.mxu0 0
    %124 = vmatpush1.bf16.msra.mxu0 0
    %125 = vmatprep.subr.bf16.mxu0 0
    %126 = vmatpush1.bf16.msra.mxu0 0
    %127 = vmatprep.subr.bf16.mxu0 0
    %128 = vmatpush1.bf16.msra.mxu0 0
    %129 = vmatprep.subr.bf16.mxu0 0
    %130 = vmatpush1.bf16.msra.mxu0 0
    %131 = vmatprep.subr.bf16.mxu0 0
    %132 = vmatpush1.bf16.msra.mxu0 0
    %133 = vmatprep.subr.bf16.mxu0 0
    %134 = vmatpush1.bf16.msra.mxu0 0
    %135 = vmatprep.subr.bf16.mxu0 0
    %136 = vmatpush1.bf16.msra.mxu0 0
    %137 = vmatprep.subr.bf16.mxu0 0
    %138 = vmatpush1.bf16.msra.mxu0 0
    %139 = vmatprep.subr.bf16.mxu0 0
    %140 = vmatpush1.bf16.msra.mxu0 0
    %141 = vmatprep.subr.bf16.mxu0 0
    %142 = vmatpush1.bf16.msra.mxu0 0
    %143 = vmatprep.subr.bf16.mxu0 0
    %144 = vmatpush1.bf16.msra.mxu0 0
    %145 = vmatprep.subr.bf16.mxu0 0
    %146 = vmatpush1.bf16.msra.mxu0 0
    %147 = vmatprep.subr.bf16.mxu0 0
    %148 = vmatpush1.bf16.msra.mxu0 0
    %149 = vmatprep.subr.bf16.mxu0 0
    %150 = vmatpush1.bf16.msra.mxu0 0
    %151 = vmatprep.mubr.bf16.mxu0 0
    %152 = vmatmul.mubr.bf16.gmra.mrb[0].mxu0 %v117
    %v153 = vpop.f32.mrb[0].mxu0
    %v154 = vadd.f32 %v53, %v153
    %v155 = vpop.f32.mrb[0].mxu0
    %v156 = vadd.f32 %v57, %v155
    %v157 = vpop.f32.mrb[0].mxu0
    %v158 = vadd.f32 %v53, %v157
    %v159 = vpop.f32.mrb[0].mxu0
    %v160 = vadd.f32 %v57, %v159
    %161 = vdwg.mxu0
    %162 = vmatprep.subr.bf16.mxu0 %v102
    %163 = vmatpush1.bf16.msra.mxu0 %v101
    %164 = vmatprep.subr.bf16.mxu0 %v106
    %165 = vmatpush1.bf16.msra.mxu0 %v105
    %166 = vmatprep.subr.bf16.mxu0 0
    %167 = vmatpush1.bf16.msra.mxu0 0
    %168 = vmatprep.subr.bf16.mxu0 0
    %169 = vmatpush1.bf16.msra.mxu0 0
    %170 = vmatprep.subr.bf16.mxu0 0
    %171 = vmatpush1.bf16.msra.mxu0 0
    %172 = vmatprep.subr.bf16.mxu0 0
    %173 = vmatpush1.bf16.msra.mxu0 0
    %174 = vmatprep.subr.bf16.mxu0 0
    %175 = vmatpush1.bf16.msra.mxu0 0
    %176 = vmatprep.subr.bf16.mxu0 0
    %177 = vmatpush1.bf16.msra.mxu0 0
    %178 = vmatprep.subr.bf16.mxu0 0
    %179 = vmatpush1.bf16.msra.mxu0 0
    %180 = vmatprep.subr.bf16.mxu0 0
    %181 = vmatpush1.bf16.msra.mxu0 0
    %182 = vmatprep.subr.bf16.mxu0 0
    %183 = vmatpush1.bf16.msra.mxu0 0
    %184 = vmatprep.subr.bf16.mxu0 0
    %185 = vmatpush1.bf16.msra.mxu0 0
    %186 = vmatprep.subr.bf16.mxu0 0
    %187 = vmatpush1.bf16.msra.mxu0 0
    %188 = vmatprep.subr.bf16.mxu0 0
    %189 = vmatpush1.bf16.msra.mxu0 0
    %190 = vmatprep.subr.bf16.mxu0 0
    %191 = vmatpush1.bf16.msra.mxu0 0
    %192 = vmatprep.subr.bf16.mxu0 0
    %193 = vmatpush1.bf16.msra.mxu0 0
    %194 = vmatprep.mubr.bf16.mxu0 0
    %195 = vmatmul.mubr.bf16.gmra.mrb[0].mxu0 %v117
    %v196 = vpop.f32.mrb[0].mxu0
    %v197 = vadd.f32 %v61, %v196
    %v198 = vpop.f32.mrb[0].mxu0
    %v199 = vadd.f32 %v65, %v198
    %v200 = vpop.f32.mrb[0].mxu0
    %v201 = vadd.f32 %v61, %v200
    %v202 = vpop.f32.mrb[0].mxu0
    %v203 = vadd.f32 %v65, %v202
    %204 = vdwg.mxu0
    %v205 = vld [vmem:[#allocation2] sm:$0xff]
    %v206 = vld [vmem:[#allocation2 + $0x8] sm:$0xff]
    %v207 = vld [vmem:[#allocation2 + $0x10] sm:$0xff]
    %v208 = vld [vmem:[#allocation2 + $0x18] sm:$0xff]
    %v209 = vld [vmem:[#allocation2 + $0x20] sm:$0xff]
    %v210 = vld [vmem:[#allocation2 + $0x28] sm:$0xff]
    %v211 = vld [vmem:[#allocation2 + $0x30] sm:$0xff]
    %v212 = vld [vmem:[#allocation2 + $0x38] sm:$0xff]
    %v213 = vld [vmem:[#allocation2 + $0x40] sm:$0xff]
    %v214 = vld [vmem:[#allocation2 + $0x48] sm:$0xff]
    %v215 = vld [vmem:[#allocation2 + $0x50] sm:$0xff]
    %v216 = vld [vmem:[#allocation2 + $0x58] sm:$0xff]
    %v217 = vld [vmem:[#allocation2 + $0x60] sm:$0xff]
    %v218 = vld [vmem:[#allocation2 + $0x68] sm:$0xff]
    %v219 = vld [vmem:[#allocation2 + $0x70] sm:$0xff]
    %v220 = vld [vmem:[#allocation2 + $0x78] sm:$0xff]
    %v221 = vld [vmem:[#allocation2 + $0x80] sm:$0xff]
    %v222 = vld [vmem:[#allocation2 + $0x88] sm:$0xff]
    %v223 = vld [vmem:[#allocation2 + $0x90] sm:$0xff]
    %v224 = vld [vmem:[#allocation2 + $0x98] sm:$0xff]
    %v225 = vld [vmem:[#allocation2 + $0xa0] sm:$0xff]
    %v226 = vld [vmem:[#allocation2 + $0xa8] sm:$0xff]
    %v227 = vld [vmem:[#allocation2 + $0xb0] sm:$0xff]
    %v228 = vld [vmem:[#allocation2 + $0xb8] sm:$0xff]
    %v229 = vld [vmem:[#allocation2 + $0xc0] sm:$0xff]
    %v230 = vld [vmem:[#allocation2 + $0xc8] sm:$0xff]
    %v231 = vld [vmem:[#allocation2 + $0xd0] sm:$0xff]
    %v232 = vld [vmem:[#allocation2 + $0xd8] sm:$0xff]
    %v233 = vld [vmem:[#allocation2 + $0xe0] sm:$0xff]
    %v234 = vld [vmem:[#allocation2 + $0xe8] sm:$0xff]
    %v235 = vld [vmem:[#allocation2 + $0xf0] sm:$0xff]
    %v236 = vld [vmem:[#allocation2 + $0xf8] sm:$0xff]
    %v269 = vunpack.c.l.b16 %v205
    %v270 = vunpack.c.h.b16 %v205
    %v271 = vunpack.c.l.b16 %v206
    %v272 = vunpack.c.h.b16 %v206
    %v273 = vunpack.c.l.b16 %v207
    %v274 = vunpack.c.h.b16 %v207
    %v275 = vunpack.c.l.b16 %v208
    %v276 = vunpack.c.h.b16 %v208
    %v277 = vunpack.c.l.b16 %v209
    %v278 = vunpack.c.h.b16 %v209
    %v279 = vunpack.c.l.b16 %v210
    %v280 = vunpack.c.h.b16 %v210
    %v281 = vunpack.c.l.b16 %v211
    %v282 = vunpack.c.h.b16 %v211
    %v283 = vunpack.c.l.b16 %v212
    %v284 = vunpack.c.h.b16 %v212
    %v285 = vunpack.c.l.b16 %v213
    %v286 = vunpack.c.h.b16 %v213
    %v287 = vunpack.c.l.b16 %v214
    %v288 = vunpack.c.h.b16 %v214
    %v289 = vunpack.c.l.b16 %v215
    %v290 = vunpack.c.h.b16 %v215
    %v291 = vunpack.c.l.b16 %v216
    %v292 = vunpack.c.h.b16 %v216
    %v293 = vunpack.c.l.b16 %v217
    %v294 = vunpack.c.h.b16 %v217
    %v295 = vunpack.c.l.b16 %v218
    %v296 = vunpack.c.h.b16 %v218
    %v297 = vunpack.c.l.b16 %v219
    %v298 = vunpack.c.h.b16 %v219
    %v299 = vunpack.c.l.b16 %v220
    %v300 = vunpack.c.h.b16 %v220
    %v301 = vunpack.c.l.b16 %v221
    %v302 = vunpack.c.h.b16 %v221
    %v303 = vunpack.c.l.b16 %v222
    %v304 = vunpack.c.h.b16 %v222
    %v305 = vunpack.c.l.b16 %v223
    %v306 = vunpack.c.h.b16 %v223
    %v307 = vunpack.c.l.b16 %v224
    %v308 = vunpack.c.h.b16 %v224
    %v309 = vunpack.c.l.b16 %v225
    %v310 = vunpack.c.h.b16 %v225
    %v311 = vunpack.c.l.b16 %v226
    %v312 = vunpack.c.h.b16 %v226
    %v313 = vunpack.c.l.b16 %v227
    %v314 = vunpack.c.h.b16 %v227
    %v315 = vunpack.c.l.b16 %v228
    %v316 = vunpack.c.h.b16 %v228
    %v317 = vunpack.c.l.b16 %v229
    %v318 = vunpack.c.h.b16 %v229
    %v319 = vunpack.c.l.b16 %v230
    %v320 = vunpack.c.h.b16 %v230
    %v321 = vunpack.c.l.b16 %v231
    %v322 = vunpack.c.h.b16 %v231
    %v323 = vunpack.c.l.b16 %v232
    %v324 = vunpack.c.h.b16 %v232
    %v325 = vunpack.c.l.b16 %v233
    %v326 = vunpack.c.h.b16 %v233
    %v327 = vunpack.c.l.b16 %v234
    %v328 = vunpack.c.h.b16 %v234
    %v329 = vunpack.c.l.b16 %v235
    %v330 = vunpack.c.h.b16 %v235
    %v331 = vunpack.c.l.b16 %v236
    %v332 = vunpack.c.h.b16 %v236
    %v333 = vpack.c.b16 %v273, %v269
    %v334 = vpack.c.b16 %v274, %v270
    %v335 = vpack.c.b16 %v275, %v271
    %v336 = vpack.c.b16 %v276, %v272
    %v337 = vpack.c.b16 %v281, %v277
    %v338 = vpack.c.b16 %v282, %v278
    %v339 = vpack.c.b16 %v283, %v279
    %v340 = vpack.c.b16 %v284, %v280
    %v341 = vpack.c.b16 %v289, %v285
    %v342 = vpack.c.b16 %v290, %v286
    %v343 = vpack.c.b16 %v291, %v287
    %v344 = vpack.c.b16 %v292, %v288
    %v345 = vpack.c.b16 %v297, %v293
    %v346 = vpack.c.b16 %v298, %v294
    %v347 = vpack.c.b16 %v299, %v295
    %v348 = vpack.c.b16 %v300, %v296
    %v349 = vpack.c.b16 %v305, %v301
    %v350 = vpack.c.b16 %v306, %v302
    %v351 = vpack.c.b16 %v307, %v303
    %v352 = vpack.c.b16 %v308, %v304
    %v353 = vpack.c.b16 %v313, %v309
    %v354 = vpack.c.b16 %v314, %v310
    %v355 = vpack.c.b16 %v315, %v311
    %v356 = vpack.c.b16 %v316, %v312
    %v357 = vpack.c.b16 %v321, %v317
    %v358 = vpack.c.b16 %v322, %v318
    %v359 = vpack.c.b16 %v323, %v319
    %v360 = vpack.c.b16 %v324, %v320
    %v361 = vpack.c.b16 %v329, %v325
    %v362 = vpack.c.b16 %v330, %v326
    %v363 = vpack.c.b16 %v331, %v327
    %v364 = vpack.c.b16 %v332, %v328
    %397 = vmatprep.subr.bf16.mxu0 %v334
    %398 = vmatpush1.bf16.msra.mxu0 %v333
    %399 = vmatprep.subr.bf16.mxu0 %v338
    %400 = vmatpush1.bf16.msra.mxu0 %v337
    %401 = vmatprep.subr.bf16.mxu0 %v342
    %402 = vmatpush1.bf16.msra.mxu0 %v341
    %403 = vmatprep.subr.bf16.mxu0 %v346
    %404 = vmatpush1.bf16.msra.mxu0 %v345
    %405 = vmatprep.subr.bf16.mxu0 %v350
    %406 = vmatpush1.bf16.msra.mxu0 %v349
    %407 = vmatprep.subr.bf16.mxu0 %v354
    %408 = vmatpush1.bf16.msra.mxu0 %v353
    %409 = vmatprep.subr.bf16.mxu0 %v358
    %410 = vmatpush1.bf16.msra.mxu0 %v357
    %411 = vmatprep.subr.bf16.mxu0 %v362
    %412 = vmatpush1.bf16.msra.mxu0 %v361
    %413 = vmatprep.subr.bf16.mxu0 0
    %414 = vmatpush1.bf16.msra.mxu0 0
    %415 = vmatprep.subr.bf16.mxu0 0
    %416 = vmatpush1.bf16.msra.mxu0 0
    %417 = vmatprep.subr.bf16.mxu0 0
    %418 = vmatpush1.bf16.msra.mxu0 0
    %419 = vmatprep.subr.bf16.mxu0 0
    %420 = vmatpush1.bf16.msra.mxu0 0
    %421 = vmatprep.subr.bf16.mxu0 0
    %422 = vmatpush1.bf16.msra.mxu0 0
    %423 = vmatprep.subr.bf16.mxu0 0
    %424 = vmatpush1.bf16.msra.mxu0 0
    %425 = vmatprep.subr.bf16.mxu0 0
    %426 = vmatpush1.bf16.msra.mxu0 0
    %427 = vmatprep.subr.bf16.mxu0 0
    %428 = vmatpush1.bf16.msra.mxu0 0
    %429 = vmatprep.mubr.bf16.mxu0 0
    %430 = vmatmul.mubr.bf16.gmra.mrb[0].mxu0 0
    %v431 = vpop.f32.mrb[0].mxu0
    %v432 = vadd.f32 0.0, %v431
    %v433 = vpop.f32.mrb[0].mxu0
    %v434 = vadd.f32 0.0, %v433
    %v435 = vpop.f32.mrb[0].mxu0
    %v436 = vpop.f32.mrb[0].mxu0
    %437 = vdwg.mxu0
    %438 = vmatprep.subr.bf16.mxu0 %v336
    %439 = vmatpush1.bf16.msra.mxu0 %v335
    %440 = vmatprep.subr.bf16.mxu0 %v340
    %441 = vmatpush1.bf16.msra.mxu0 %v339
    %442 = vmatprep.subr.bf16.mxu0 %v344
    %443 = vmatpush1.bf16.msra.mxu0 %v343
    %444 = vmatprep.subr.bf16.mxu0 %v348
    %445 = vmatpush1.bf16.msra.mxu0 %v347
    %446 = vmatprep.subr.bf16.mxu0 %v352
    %447 = vmatpush1.bf16.msra.mxu0 %v351
    %448 = vmatprep.subr.bf16.mxu0 %v356
    %449 = vmatpush1.bf16.msra.mxu0 %v355
    %450 = vmatprep.subr.bf16.mxu0 %v360
    %451 = vmatpush1.bf16.msra.mxu0 %v359
    %452 = vmatprep.subr.bf16.mxu0 %v364
    %453 = vmatpush1.bf16.msra.mxu0 %v363
    %454 = vmatprep.subr.bf16.mxu0 0
    %455 = vmatpush1.bf16.msra.mxu0 0
    %456 = vmatprep.subr.bf16.mxu0 0
    %457 = vmatpush1.bf16.msra.mxu0 0
    %458 = vmatprep.subr.bf16.mxu0 0
    %459 = vmatpush1.bf16.msra.mxu0 0
    %460 = vmatprep.subr.bf16.mxu0 0
    %461 = vmatpush1.bf16.msra.mxu0 0
    %462 = vmatprep.subr.bf16.mxu0 0
    %463 = vmatpush1.bf16.msra.mxu0 0
    %464 = vmatprep.subr.bf16.mxu0 0
    %465 = vmatpush1.bf16.msra.mxu0 0
    %466 = vmatprep.subr.bf16.mxu0 0
    %467 = vmatpush1.bf16.msra.mxu0 0
    %468 = vmatprep.subr.bf16.mxu0 0
    %469 = vmatpush1.bf16.msra.mxu0 0
    %470 = vmatprep.mubr.bf16.mxu0 0
    %471 = vmatmul.mubr.bf16.gmra.mrb[0].mxu0 0
    %v472 = vpop.f32.mrb[0].mxu0
    %v473 = vadd.f32 0.0, %v472
    %v474 = vpop.f32.mrb[0].mxu0
    %v475 = vadd.f32 0.0, %v474
    %v476 = vpop.f32.mrb[0].mxu0
    %v477 = vpop.f32.mrb[0].mxu0
    %478 = vdwg.mxu0
    %v479 = vadd.f32 %v154, %v432
    %v480 = vadd.f32 %v156, %v434
    %v481 = vadd.f32 %v197, %v473
    %v482 = vadd.f32 %v199, %v475
    %v483 = vxor.u32 %v479, 2147483648
    %v484 = vmul.f32 %v483, 1.442695
    %v485 = vpow.pop %v484
    %v486 = vadd.f32 %v485, 1.0
    %v487 = vrcp.pop %v486
    %v488 = vmul.f32 1.0, %v487
    %v489 = vxor.u32 %v480, 2147483648
    %v490 = vmul.f32 %v489, 1.442695
    %v491 = vpow.pop %v490
    %v492 = vadd.f32 %v491, 1.0
    %v493 = vrcp.pop %v492
    %v494 = vmul.f32 1.0, %v493
    %v495 = vtanh.pop %v481
    %v496 = vxor.u32 %v482, 2147483648
    %v497 = vmul.f32 %v496, 1.442695
    %v498 = vpow.pop %v497
    %v499 = vadd.f32 %v498, 1.0
    %v500 = vrcp.pop %v499
    %v501 = vmul.f32 1.0, %v500
    %v502 = vmul.f32 %v494, 0.0
    %v503 = vmul.f32 %v488, %v495
    %v504 = vadd.f32 %v502, %v503
    %v505 = vtanh.pop %v504
    %v506 = vmul.f32 %v501, %v505
    %v507 = vpack.c.bf16 %v506, %v506
    %508 = vmatprep.subr.bf16.mxu0 %v334
    %509 = vmatpush1.bf16.msra.mxu0 %v333
    %510 = vmatprep.subr.bf16.mxu0 %v338
    %511 = vmatpush1.bf16.msra.mxu0 %v337
    %512 = vmatprep.subr.bf16.mxu0 %v342
    %513 = vmatpush1.bf16.msra.mxu0 %v341
    %514 = vmatprep.subr.bf16.mxu0 %v346
    %515 = vmatpush1.bf16.msra.mxu0 %v345
    %516 = vmatprep.subr.bf16.mxu0 %v350
    %517 = vmatpush1.bf16.msra.mxu0 %v349
    %518 = vmatprep.subr.bf16.mxu0 %v354
    %519 = vmatpush1.bf16.msra.mxu0 %v353
    %520 = vmatprep.subr.bf16.mxu0 %v358
    %521 = vmatpush1.bf16.msra.mxu0 %v357
    %522 = vmatprep.subr.bf16.mxu0 %v362
    %523 = vmatpush1.bf16.msra.mxu0 %v361
    %524 = vmatprep.subr.bf16.mxu0 0
    %525 = vmatpush1.bf16.msra.mxu0 0
    %526 = vmatprep.subr.bf16.mxu0 0
    %527 = vmatpush1.bf16.msra.mxu0 0
    %528 = vmatprep.subr.bf16.mxu0 0
    %529 = vmatpush1.bf16.msra.mxu0 0
    %530 = vmatprep.subr.bf16.mxu0 0
    %531 = vmatpush1.bf16.msra.mxu0 0
    %532 = vmatprep.subr.bf16.mxu0 0
    %533 = vmatpush1.bf16.msra.mxu0 0
    %534 = vmatprep.subr.bf16.mxu0 0
    %535 = vmatpush1.bf16.msra.mxu0 0
    %536 = vmatprep.subr.bf16.mxu0 0
    %537 = vmatpush1.bf16.msra.mxu0 0
    %538 = vmatprep.subr.bf16.mxu0 0
    %539 = vmatpush1.bf16.msra.mxu0 0
    %540 = vmatprep.mubr.bf16.mxu0 0
    %541 = vmatmul.mubr.bf16.gmra.mrb[0].mxu0 %v507
    %v542 = vpop.f32.mrb[0].mxu0
    %v543 = vadd.f32 0.0, %v542
    %v544 = vpop.f32.mrb[0].mxu0
    %v545 = vadd.f32 0.0, %v544
    %v546 = vpop.f32.mrb[0].mxu0
    %v547 = vpop.f32.mrb[0].mxu0
    %548 = vdwg.mxu0
    %549 = vmatprep.subr.bf16.mxu0 %v336
    %550 = vmatpush1.bf16.msra.mxu0 %v335
    %551 = vmatprep.subr.bf16.mxu0 %v340
    %552 = vmatpush1.bf16.msra.mxu0 %v339
    %553 = vmatprep.subr.bf16.mxu0 %v344
    %554 = vmatpush1.bf16.msra.mxu0 %v343
    %555 = vmatprep.subr.bf16.mxu0 %v348
    %556 = vmatpush1.bf16.msra.mxu0 %v347
    %557 = vmatprep.subr.bf16.mxu0 %v352
    %558 = vmatpush1.bf16.msra.mxu0 %v351
    %559 = vmatprep.subr.bf16.mxu0 %v356
    %560 = vmatpush1.bf16.msra.mxu0 %v355
    %561 = vmatprep.subr.bf16.mxu0 %v360
    %562 = vmatpush1.bf16.msra.mxu0 %v359
    %563 = vmatprep.subr.bf16.mxu0 %v364
    %564 = vmatpush1.bf16.msra.mxu0 %v363
    %565 = vmatprep.subr.bf16.mxu0 0
    %566 = vmatpush1.bf16.msra.mxu0 0
    %567 = vmatprep.subr.bf16.mxu0 0
    %568 = vmatpush1.bf16.msra.mxu0 0
    %569 = vmatprep.subr.bf16.mxu0 0
    %570 = vmatpush1.bf16.msra.mxu0 0
    %571 = vmatprep.subr.bf16.mxu0 0
    %572 = vmatpush1.bf16.msra.mxu0 0
    %573 = vmatprep.subr.bf16.mxu0 0
    %574 = vmatpush1.bf16.msra.mxu0 0
    %575 = vmatprep.subr.bf16.mxu0 0
    %576 = vmatpush1.bf16.msra.mxu0 0
    %577 = vmatprep.subr.bf16.mxu0 0
    %578 = vmatpush1.bf16.msra.mxu0 0
    %579 = vmatprep.subr.bf16.mxu0 0
    %580 = vmatpush1.bf16.msra.mxu0 0
    %581 = vmatprep.mubr.bf16.mxu0 0
    %582 = vmatmul.mubr.bf16.gmra.mrb[0].mxu0 %v507
    %v583 = vpop.f32.mrb[0].mxu0
    %v584 = vadd.f32 0.0, %v583
    %v585 = vpop.f32.mrb[0].mxu0
    %v586 = vadd.f32 0.0, %v585
    %v587 = vpop.f32.mrb[0].mxu0
    %v588 = vpop.f32.mrb[0].mxu0
    %589 = vdwg.mxu0
    %v594 = vrot.slane %v543, 6
    %v595 = vrot.slane %v545, 6
    %v596 = vrot.slane %v584, 6
    %v597 = vrot.slane %v586, 6
    %v602 = vadd.f32 %v154, %v594
    %v603 = vadd.f32 %v156, %v595
    %v604 = vadd.f32 %v197, %v596
    %v605 = vadd.f32 %v199, %v597
    %v606 = vxor.u32 %v602, 2147483648
    %v607 = vmul.f32 %v606, 1.442695
    %v608 = vpow.pop %v607
    %v609 = vadd.f32 %v608, 1.0
    %v610 = vrcp.pop %v609
    %v611 = vmul.f32 1.0, %v610
    %v612 = vxor.u32 %v603, 2147483648
    %v613 = vmul.f32 %v612, 1.442695
    %v614 = vpow.pop %v613
    %v615 = vadd.f32 %v614, 1.0
    %v616 = vrcp.pop %v615
    %v617 = vmul.f32 1.0, %v616
    %v618 = vtanh.pop %v604
    %v619 = vxor.u32 %v605, 2147483648
    %v620 = vmul.f32 %v619, 1.442695
    %v621 = vpow.pop %v620
    %v622 = vadd.f32 %v621, 1.0
    %v623 = vrcp.pop %v622
    %v624 = vmul.f32 1.0, %v623
    %v626 = vrot.slane %v504, 6
    %v628 = vmul.f32 %v617, %v626
    %v629 = vmul.f32 %v611, %v618
    %v630 = vadd.f32 %v628, %v629
    %v631 = vtanh.pop %v630
    %v632 = vmul.f32 %v624, %v631
    %v633 = vpack.c.bf16 %v632, %v632
    %v635 = vrot.slane %v633, 1
    %637 = vmatprep.subr.bf16.mxu0 %v334
    %638 = vmatpush1.bf16.msra.mxu0 %v333
    %639 = vmatprep.subr.bf16.mxu0 %v338
    %640 = vmatpush1.bf16.msra.mxu0 %v337
    %641 = vmatprep.subr.bf16.mxu0 %v342
    %642 = vmatpush1.bf16.msra.mxu0 %v341
    %643 = vmatprep.subr.bf16.mxu0 %v346
    %644 = vmatpush1.bf16.msra.mxu0 %v345
    %645 = vmatprep.subr.bf16.mxu0 %v350
    %646 = vmatpush1.bf16.msra.mxu0 %v349
    %647 = vmatprep.subr.bf16.mxu0 %v354
    %648 = vmatpush1.bf16.msra.mxu0 %v353
    %649 = vmatprep.subr.bf16.mxu0 %v358
    %650 = vmatpush1.bf16.msra.mxu0 %v357
    %651 = vmatprep.subr.bf16.mxu0 %v362
    %652 = vmatpush1.bf16.msra.mxu0 %v361
    %653 = vmatprep.subr.bf16.mxu0 0
    %654 = vmatpush1.bf16.msra.mxu0 0
    %655 = vmatprep.subr.bf16.mxu0 0
    %656 = vmatpush1.bf16.msra.mxu0 0
    %657 = vmatprep.subr.bf16.mxu0 0
    %658 = vmatpush1.bf16.msra.mxu0 0
    %659 = vmatprep.subr.bf16.mxu0 0
    %660 = vmatpush1.bf16.msra.mxu0 0
    %661 = vmatprep.subr.bf16.mxu0 0
    %662 = vmatpush1.bf16.msra.mxu0 0
    %663 = vmatprep.subr.bf16.mxu0 0
    %664 = vmatpush1.bf16.msra.mxu0 0
    %665 = vmatprep.subr.bf16.mxu0 0
    %666 = vmatpush1.bf16.msra.mxu0 0
    %667 = vmatprep.subr.bf16.mxu0 0
    %668 = vmatpush1.bf16.msra.mxu0 0
    %669 = vmatprep.mubr.bf16.mxu0 0
    %670 = vmatmul.mubr.bf16.gmra.mrb[0].mxu0 %v635
    %v671 = vpop.f32.mrb[0].mxu0
    %v672 = vadd.f32 0.0, %v671
    %v673 = vpop.f32.mrb[0].mxu0
    %v674 = vadd.f32 0.0, %v673
    %v675 = vpop.f32.mrb[0].mxu0
    %v676 = vpop.f32.mrb[0].mxu0
    %677 = vdwg.mxu0
    %678 = vmatprep.subr.bf16.mxu0 %v336
    %679 = vmatpush1.bf16.msra.mxu0 %v335
    %680 = vmatprep.subr.bf16.mxu0 %v340
    %681 = vmatpush1.bf16.msra.mxu0 %v339
    %682 = vmatprep.subr.bf16.mxu0 %v344
    %683 = vmatpush1.bf16.msra.mxu0 %v343
    %684 = vmatprep.subr.bf16.mxu0 %v348
    %685 = vmatpush1.bf16.msra.mxu0 %v347
    %686 = vmatprep.subr.bf16.mxu0 %v352
    %687 = vmatpush1.bf16.msra.mxu0 %v351
    %688 = vmatprep.subr.bf16.mxu0 %v356
    %689 = vmatpush1.bf16.msra.mxu0 %v355
    %690 = vmatprep.subr.bf16.mxu0 %v360
    %691 = vmatpush1.bf16.msra.mxu0 %v359
    %692 = vmatprep.subr.bf16.mxu0 %v364
    %693 = vmatpush1.bf16.msra.mxu0 %v363
    %694 = vmatprep.subr.bf16.mxu0 0
    %695 = vmatpush1.bf16.msra.mxu0 0
    %696 = vmatprep.subr.bf16.mxu0 0
    %697 = vmatpush1.bf16.msra.mxu0 0
    %698 = vmatprep.subr.bf16.mxu0 0
    %699 = vmatpush1.bf16.msra.mxu0 0
    %700 = vmatprep.subr.bf16.mxu0 0
    %701 = vmatpush1.bf16.msra.mxu0 0
    %702 = vmatprep.subr.bf16.mxu0 0
    %703 = vmatpush1.bf16.msra.mxu0 0
    %704 = vmatprep.subr.bf16.mxu0 0
    %705 = vmatpush1.bf16.msra.mxu0 0
    %706 = vmatprep.subr.bf16.mxu0 0
    %707 = vmatpush1.bf16.msra.mxu0 0
    %708 = vmatprep.subr.bf16.mxu0 0
    %709 = vmatpush1.bf16.msra.mxu0 0
    %710 = vmatprep.mubr.bf16.mxu0 0
    %711 = vmatmul.mubr.bf16.gmra.mrb[0].mxu0 %v635
    %v712 = vpop.f32.mrb[0].mxu0
    %v713 = vadd.f32 0.0, %v712
    %v714 = vpop.f32.mrb[0].mxu0
    %v715 = vadd.f32 0.0, %v714
    %v716 = vpop.f32.mrb[0].mxu0
    %v717 = vpop.f32.mrb[0].mxu0
    %718 = vdwg.mxu0
    %v723 = vrot.slane %v672, 4
    %v724 = vrot.slane %v674, 4
    %v725 = vrot.slane %v713, 4
    %v726 = vrot.slane %v715, 4
    %v731 = vadd.f32 %v154, %v723
    %v732 = vadd.f32 %v156, %v724
    %v733 = vadd.f32 %v197, %v725
    %v734 = vadd.f32 %v199, %v726
    %v735 = vxor.u32 %v731, 2147483648
    %v736 = vmul.f32 %v735, 1.442695
    %v737 = vpow.pop %v736
    %v738 = vadd.f32 %v737, 1.0
    %v739 = vrcp.pop %v738
    %v740 = vmul.f32 1.0, %v739
    %v741 = vxor.u32 %v732, 2147483648
    %v742 = vmul.f32 %v741, 1.442695
    %v743 = vpow.pop %v742
    %v744 = vadd.f32 %v743, 1.0
    %v745 = vrcp.pop %v744
    %v746 = vmul.f32 1.0, %v745
    %v747 = vtanh.pop %v733
    %v748 = vxor.u32 %v734, 2147483648
    %v749 = vmul.f32 %v748, 1.442695
    %v750 = vpow.pop %v749
    %v751 = vadd.f32 %v750, 1.0
    %v752 = vrcp.pop %v751
    %v753 = vmul.f32 1.0, %v752
    %v755 = vrot.slane %v630, 6
    %v757 = vmul.f32 %v746, %v755
    %v758 = vmul.f32 %v740, %v747
    %v759 = vadd.f32 %v757, %v758
    %v760 = vtanh.pop %v759
    %v761 = vmul.f32 %v753, %v760
    %v762 = vpack.c.bf16 %v761, %v761
    %v764 = vrot.slane %v762, 2
    %766 = vmatprep.subr.bf16.mxu0 %v334
    %767 = vmatpush1.bf16.msra.mxu0 %v333
    %768 = vmatprep.subr.bf16.mxu0 %v338
    %769 = vmatpush1.bf16.msra.mxu0 %v337
    %770 = vmatprep.subr.bf16.mxu0 %v342
    %771 = vmatpush1.bf16.msra.mxu0 %v341
    %772 = vmatprep.subr.bf16.mxu0 %v346
    %773 = vmatpush1.bf16.msra.mxu0 %v345
    %774 = vmatprep.subr.bf16.mxu0 %v350
    %775 = vmatpush1.bf16.msra.mxu0 %v349
    %776 = vmatprep.subr.bf16.mxu0 %v354
    %777 = vmatpush1.bf16.msra.mxu0 %v353
    %778 = vmatprep.subr.bf16.mxu0 %v358
    %779 = vmatpush1.bf16.msra.mxu0 %v357
    %780 = vmatprep.subr.bf16.mxu0 %v362
    %781 = vmatpush1.bf16.msra.mxu0 %v361
    %782 = vmatprep.subr.bf16.mxu0 0
    %783 = vmatpush1.bf16.msra.mxu0 0
    %784 = vmatprep.subr.bf16.mxu0 0
    %785 = vmatpush1.bf16.msra.mxu0 0
    %786 = vmatprep.subr.bf16.mxu0 0
    %787 = vmatpush1.bf16.msra.mxu0 0
    %788 = vmatprep.subr.bf16.mxu0 0
    %789 = vmatpush1.bf16.msra.mxu0 0
    %790 = vmatprep.subr.bf16.mxu0 0
    %791 = vmatpush1.bf16.msra.mxu0 0
    %792 = vmatprep.subr.bf16.mxu0 0
    %793 = vmatpush1.bf16.msra.mxu0 0
    %794 = vmatprep.subr.bf16.mxu0 0
    %795 = vmatpush1.bf16.msra.mxu0 0
    %796 = vmatprep.subr.bf16.mxu0 0
    %797 = vmatpush1.bf16.msra.mxu0 0
    %798 = vmatprep.mubr.bf16.mxu0 0
    %799 = vmatmul.mubr.bf16.gmra.mrb[0].mxu0 %v764
    %v800 = vpop.f32.mrb[0].mxu0
    %v801 = vadd.f32 0.0, %v800
    %v802 = vpop.f32.mrb[0].mxu0
    %v803 = vadd.f32 0.0, %v802
    %v804 = vpop.f32.mrb[0].mxu0
    %v805 = vpop.f32.mrb[0].mxu0
    %806 = vdwg.mxu0
    %807 = vmatprep.subr.bf16.mxu0 %v336
    %808 = vmatpush1.bf16.msra.mxu0 %v335
    %809 = vmatprep.subr.bf16.mxu0 %v340
    %810 = vmatpush1.bf16.msra.mxu0 %v339
    %811 = vmatprep.subr.bf16.mxu0 %v344
    %812 = vmatpush1.bf16.msra.mxu0 %v343
    %813 = vmatprep.subr.bf16.mxu0 %v348
    %814 = vmatpush1.bf16.msra.mxu0 %v347
    %815 = vmatprep.subr.bf16.mxu0 %v352
    %816 = vmatpush1.bf16.msra.mxu0 %v351
    %817 = vmatprep.subr.bf16.mxu0 %v356
    %818 = vmatpush1.bf16.msra.mxu0 %v355
    %819 = vmatprep.subr.bf16.mxu0 %v360
    %820 = vmatpush1.bf16.msra.mxu0 %v359
    %821 = vmatprep.subr.bf16.mxu0 %v364
    %822 = vmatpush1.bf16.msra.mxu0 %v363
    %823 = vmatprep.subr.bf16.mxu0 0
    %824 = vmatpush1.bf16.msra.mxu0 0
    %825 = vmatprep.subr.bf16.mxu0 0
    %826 = vmatpush1.bf16.msra.mxu0 0
    %827 = vmatprep.subr.bf16.mxu0 0
    %828 = vmatpush1.bf16.msra.mxu0 0
    %829 = vmatprep.subr.bf16.mxu0 0
    %830 = vmatpush1.bf16.msra.mxu0 0
    %831 = vmatprep.subr.bf16.mxu0 0
    %832 = vmatpush1.bf16.msra.mxu0 0
    %833 = vmatprep.subr.bf16.mxu0 0
    %834 = vmatpush1.bf16.msra.mxu0 0
    %835 = vmatprep.subr.bf16.mxu0 0
    %836 = vmatpush1.bf16.msra.mxu0 0
    %837 = vmatprep.subr.bf16.mxu0 0
    %838 = vmatpush1.bf16.msra.mxu0 0
    %839 = vmatprep.mubr.bf16.mxu0 0
    %840 = vmatmul.mubr.bf16.gmra.mrb[0].mxu0 %v764
    %v841 = vpop.f32.mrb[0].mxu0
    %v842 = vadd.f32 0.0, %v841
    %v843 = vpop.f32.mrb[0].mxu0
    %v844 = vadd.f32 0.0, %v843
    %v845 = vpop.f32.mrb[0].mxu0
    %v846 = vpop.f32.mrb[0].mxu0
    %847 = vdwg.mxu0
    %v852 = vrot.slane %v801, 2
    %v853 = vrot.slane %v803, 2
    %v854 = vrot.slane %v842, 2
    %v855 = vrot.slane %v844, 2
    %v860 = vadd.f32 %v154, %v852
    %v861 = vadd.f32 %v156, %v853
    %v862 = vadd.f32 %v197, %v854
    %v863 = vadd.f32 %v199, %v855
    %v864 = vxor.u32 %v860, 2147483648
    %v865 = vmul.f32 %v864, 1.442695
    %v866 = vpow.pop %v865
    %v867 = vadd.f32 %v866, 1.0
    %v868 = vrcp.pop %v867
    %v869 = vmul.f32 1.0, %v868
    %v870 = vxor.u32 %v861, 2147483648
    %v871 = vmul.f32 %v870, 1.442695
    %v872 = vpow.pop %v871
    %v873 = vadd.f32 %v872, 1.0
    %v874 = vrcp.pop %v873
    %v875 = vmul.f32 1.0, %v874
    %v876 = vtanh.pop %v862
    %v877 = vxor.u32 %v863, 2147483648
    %v878 = vmul.f32 %v877, 1.442695
    %v879 = vpow.pop %v878
    %v880 = vadd.f32 %v879, 1.0
    %v881 = vrcp.pop %v880
    %v882 = vmul.f32 1.0, %v881
    %v884 = vrot.slane %v759, 6
    %v886 = vmul.f32 %v875, %v884
    %v887 = vmul.f32 %v869, %v876
    %v888 = vadd.f32 %v886, %v887
    %v889 = vtanh.pop %v888
    %v890 = vmul.f32 %v882, %v889
    %v891 = vpack.c.bf16 %v890, %v890
    %v893 = vrot.slane %v891, 3
    %895 = vmatprep.subr.bf16.mxu0 %v334
    %896 = vmatpush1.bf16.msra.mxu0 %v333
    %897 = vmatprep.subr.bf16.mxu0 %v338
    %898 = vmatpush1.bf16.msra.mxu0 %v337
    %899 = vmatprep.subr.bf16.mxu0 %v342
    %900 = vmatpush1.bf16.msra.mxu0 %v341
    %901 = vmatprep.subr.bf16.mxu0 %v346
    %902 = vmatpush1.bf16.msra.mxu0 %v345
    %903 = vmatprep.subr.bf16.mxu0 %v350
    %904 = vmatpush1.bf16.msra.mxu0 %v349
    %905 = vmatprep.subr.bf16.mxu0 %v354
    %906 = vmatpush1.bf16.msra.mxu0 %v353
    %907 = vmatprep.subr.bf16.mxu0 %v358
    %908 = vmatpush1.bf16.msra.mxu0 %v357
    %909 = vmatprep.subr.bf16.mxu0 %v362
    %910 = vmatpush1.bf16.msra.mxu0 %v361
    %911 = vmatprep.subr.bf16.mxu0 0
    %912 = vmatpush1.bf16.msra.mxu0 0
    %913 = vmatprep.subr.bf16.mxu0 0
    %914 = vmatpush1.bf16.msra.mxu0 0
    %915 = vmatprep.subr.bf16.mxu0 0
    %916 = vmatpush1.bf16.msra.mxu0 0
    %917 = vmatprep.subr.bf16.mxu0 0
    %918 = vmatpush1.bf16.msra.mxu0 0
    %919 = vmatprep.subr.bf16.mxu0 0
    %920 = vmatpush1.bf16.msra.mxu0 0
    %921 = vmatprep.subr.bf16.mxu0 0
    %922 = vmatpush1.bf16.msra.mxu0 0
    %923 = vmatprep.subr.bf16.mxu0 0
    %924 = vmatpush1.bf16.msra.mxu0 0
    %925 = vmatprep.subr.bf16.mxu0 0
    %926 = vmatpush1.bf16.msra.mxu0 0
    %927 = vmatprep.mubr.bf16.mxu0 0
    %928 = vmatmul.mubr.bf16.gmra.mrb[0].mxu0 %v893
    %v929 = vpop.f32.mrb[0].mxu0
    %v930 = vadd.f32 0.0, %v929
    %v931 = vpop.f32.mrb[0].mxu0
    %v932 = vadd.f32 0.0, %v931
    %v933 = vpop.f32.mrb[0].mxu0
    %v934 = vpop.f32.mrb[0].mxu0
    %935 = vdwg.mxu0
    %936 = vmatprep.subr.bf16.mxu0 %v336
    %937 = vmatpush1.bf16.msra.mxu0 %v335
    %938 = vmatprep.subr.bf16.mxu0 %v340
    %939 = vmatpush1.bf16.msra.mxu0 %v339
    %940 = vmatprep.subr.bf16.mxu0 %v344
    %941 = vmatpush1.bf16.msra.mxu0 %v343
    %942 = vmatprep.subr.bf16.mxu0 %v348
    %943 = vmatpush1.bf16.msra.mxu0 %v347
    %944 = vmatprep.subr.bf16.mxu0 %v352
    %945 = vmatpush1.bf16.msra.mxu0 %v351
    %946 = vmatprep.subr.bf16.mxu0 %v356
    %947 = vmatpush1.bf16.msra.mxu0 %v355
    %948 = vmatprep.subr.bf16.mxu0 %v360
    %949 = vmatpush1.bf16.msra.mxu0 %v359
    %950 = vmatprep.subr.bf16.mxu0 %v364
    %951 = vmatpush1.bf16.msra.mxu0 %v363
    %952 = vmatprep.subr.bf16.mxu0 0
    %953 = vmatpush1.bf16.msra.mxu0 0
    %954 = vmatprep.subr.bf16.mxu0 0
    %955 = vmatpush1.bf16.msra.mxu0 0
    %956 = vmatprep.subr.bf16.mxu0 0
    %957 = vmatpush1.bf16.msra.mxu0 0
    %958 = vmatprep.subr.bf16.mxu0 0
    %959 = vmatpush1.bf16.msra.mxu0 0
    %960 = vmatprep.subr.bf16.mxu0 0
    %961 = vmatpush1.bf16.msra.mxu0 0
    %962 = vmatprep.subr.bf16.mxu0 0
    %963 = vmatpush1.bf16.msra.mxu0 0
    %964 = vmatprep.subr.bf16.mxu0 0
    %965 = vmatpush1.bf16.msra.mxu0 0
    %966 = vmatprep.subr.bf16.mxu0 0
    %967 = vmatpush1.bf16.msra.mxu0 0
    %968 = vmatprep.mubr.bf16.mxu0 0
    %969 = vmatmul.mubr.bf16.gmra.mrb[0].mxu0 %v893
    %v970 = vpop.f32.mrb[0].mxu0
    %v971 = vadd.f32 0.0, %v970
    %v972 = vpop.f32.mrb[0].mxu0
    %v973 = vadd.f32 0.0, %v972
    %v974 = vpop.f32.mrb[0].mxu0
    %v975 = vpop.f32.mrb[0].mxu0
    %976 = vdwg.mxu0
    %v977 = vadd.f32 %v158, %v930
    %v978 = vadd.f32 %v160, %v932
    %v979 = vadd.f32 %v201, %v971
    %v980 = vadd.f32 %v203, %v973
    %v981 = vxor.u32 %v977, 2147483648
    %v982 = vmul.f32 %v981, 1.442695
    %v983 = vpow.pop %v982
    %v984 = vadd.f32 %v983, 1.0
    %v985 = vrcp.pop %v984
    %v986 = vmul.f32 1.0, %v985
    %v987 = vxor.u32 %v978, 2147483648
    %v988 = vmul.f32 %v987, 1.442695
    %v989 = vpow.pop %v988
    %v990 = vadd.f32 %v989, 1.0
    %v991 = vrcp.pop %v990
    %v992 = vmul.f32 1.0, %v991
    %v993 = vtanh.pop %v979
    %v994 = vxor.u32 %v980, 2147483648
    %v995 = vmul.f32 %v994, 1.442695
    %v996 = vpow.pop %v995
    %v997 = vadd.f32 %v996, 1.0
    %v998 = vrcp.pop %v997
    %v999 = vmul.f32 1.0, %v998
    %v1001 = vrot.slane %v888, 6
    %v1003 = vmul.f32 %v992, %v1001
    %v1004 = vmul.f32 %v986, %v993
    %v1005 = vadd.f32 %v1003, %v1004
    %v1006 = vtanh.pop %v1005
    %v1007 = vmul.f32 %v999, %v1006
    %v1008 = vpack.c.bf16 %v1007, %v1007
    %1009 = vmatprep.subr.bf16.mxu0 %v334
    %1010 = vmatpush1.bf16.msra.mxu0 %v333
    %1011 = vmatprep.subr.bf16.mxu0 %v338
    %1012 = vmatpush1.bf16.msra.mxu0 %v337
    %1013 = vmatprep.subr.bf16.mxu0 %v342
    %1014 = vmatpush1.bf16.msra.mxu0 %v341
    %1015 = vmatprep.subr.bf16.mxu0 %v346
    %1016 = vmatpush1.bf16.msra.mxu0 %v345
    %1017 = vmatprep.subr.bf16.mxu0 %v350
    %1018 = vmatpush1.bf16.msra.mxu0 %v349
    %1019 = vmatprep.subr.bf16.mxu0 %v354
    %1020 = vmatpush1.bf16.msra.mxu0 %v353
    %1021 = vmatprep.subr.bf16.mxu0 %v358
    %1022 = vmatpush1.bf16.msra.mxu0 %v357
    %1023 = vmatprep.subr.bf16.mxu0 %v362
    %1024 = vmatpush1.bf16.msra.mxu0 %v361
    %1025 = vmatprep.subr.bf16.mxu0 0
    %1026 = vmatpush1.bf16.msra.mxu0 0
    %1027 = vmatprep.subr.bf16.mxu0 0
    %1028 = vmatpush1.bf16.msra.mxu0 0
    %1029 = vmatprep.subr.bf16.mxu0 0
    %1030 = vmatpush1.bf16.msra.mxu0 0
    %1031 = vmatprep.subr.bf16.mxu0 0
    %1032 = vmatpush1.bf16.msra.mxu0 0
    %1033 = vmatprep.subr.bf16.mxu0 0
    %1034 = vmatpush1.bf16.msra.mxu0 0
    %1035 = vmatprep.subr.bf16.mxu0 0
    %1036 = vmatpush1.bf16.msra.mxu0 0
    %1037 = vmatprep.subr.bf16.mxu0 0
    %1038 = vmatpush1.bf16.msra.mxu0 0
    %1039 = vmatprep.subr.bf16.mxu0 0
    %1040 = vmatpush1.bf16.msra.mxu0 0
    %1041 = vmatprep.mubr.bf16.mxu0 0
    %1042 = vmatmul.mubr.bf16.gmra.mrb[0].mxu0 %v1008
    %v1043 = vpop.f32.mrb[0].mxu0
    %v1044 = vadd.f32 0.0, %v1043
    %v1045 = vpop.f32.mrb[0].mxu0
    %v1046 = vadd.f32 0.0, %v1045
    %v1047 = vpop.f32.mrb[0].mxu0
    %v1048 = vpop.f32.mrb[0].mxu0
    %1049 = vdwg.mxu0
    %1050 = vmatprep.subr.bf16.mxu0 %v336
    %1051 = vmatpush1.bf16.msra.mxu0 %v335
    %1052 = vmatprep.subr.bf16.mxu0 %v340
    %1053 = vmatpush1.bf16.msra.mxu0 %v339
    %1054 = vmatprep.subr.bf16.mxu0 %v344
    %1055 = vmatpush1.bf16.msra.mxu0 %v343
    %1056 = vmatprep.subr.bf16.mxu0 %v348
    %1057 = vmatpush1.bf16.msra.mxu0 %v347
    %1058 = vmatprep.subr.bf16.mxu0 %v352
    %1059 = vmatpush1.bf16.msra.mxu0 %v351
    %1060 = vmatprep.subr.bf16.mxu0 %v356
    %1061 = vmatpush1.bf16.msra.mxu0 %v355
    %1062 = vmatprep.subr.bf16.mxu0 %v360
    %1063 = vmatpush1.bf16.msra.mxu0 %v359
    %1064 = vmatprep.subr.bf16.mxu0 %v364
    %1065 = vmatpush1.bf16.msra.mxu0 %v363
    %1066 = vmatprep.subr.bf16.mxu0 0
    %1067 = vmatpush1.bf16.msra.mxu0 0
    %1068 = vmatprep.subr.bf16.mxu0 0
    %1069 = vmatpush1.bf16.msra.mxu0 0
    %1070 = vmatprep.subr.bf16.mxu0 0
    %1071 = vmatpush1.bf16.msra.mxu0 0
    %1072 = vmatprep.subr.bf16.mxu0 0
    %1073 = vmatpush1.bf16.msra.mxu0 0
    %1074 = vmatprep.subr.bf16.mxu0 0
    %1075 = vmatpush1.bf16.msra.mxu0 0
    %1076 = vmatprep.subr.bf16.mxu0 0
    %1077 = vmatpush1.bf16.msra.mxu0 0
    %1078 = vmatprep.subr.bf16.mxu0 0
    %1079 = vmatpush1.bf16.msra.mxu0 0
    %1080 = vmatprep.subr.bf16.mxu0 0
    %1081 = vmatpush1.bf16.msra.mxu0 0
    %1082 = vmatprep.mubr.bf16.mxu0 0
    %1083 = vmatmul.mubr.bf16.gmra.mrb[0].mxu0 %v1008
    %v1084 = vpop.f32.mrb[0].mxu0
    %v1085 = vadd.f32 0.0, %v1084
    %v1086 = vpop.f32.mrb[0].mxu0
    %v1087 = vadd.f32 0.0, %v1086
    %v1088 = vpop.f32.mrb[0].mxu0
    %v1089 = vpop.f32.mrb[0].mxu0
    %1090 = vdwg.mxu0
    %v1095 = vrot.slane %v1044, 6
    %v1096 = vrot.slane %v1046, 6
    %v1097 = vrot.slane %v1085, 6
    %v1098 = vrot.slane %v1087, 6
    %v1103 = vadd.f32 %v158, %v1095
    %v1104 = vadd.f32 %v160, %v1096
    %v1105 = vadd.f32 %v201, %v1097
    %v1106 = vadd.f32 %v203, %v1098
    %v1107 = vxor.u32 %v1103, 2147483648
    %v1108 = vmul.f32 %v1107, 1.442695
    %v1109 = vpow.pop %v1108
    %v1110 = vadd.f32 %v1109, 1.0
    %v1111 = vrcp.pop %v1110
    %v1112 = vmul.f32 1.0, %v1111
    %v1113 = vxor.u32 %v1104, 2147483648
    %v1114 = vmul.f32 %v1113, 1.442695
    %v1115 = vpow.pop %v1114
    %v1116 = vadd.f32 %v1115, 1.0
    %v1117 = vrcp.pop %v1116
    %v1118 = vmul.f32 1.0, %v1117
    %v1119 = vtanh.pop %v1105
    %v1120 = vxor.u32 %v1106, 2147483648
    %v1121 = vmul.f32 %v1120, 1.442695
    %v1122 = vpow.pop %v1121
    %v1123 = vadd.f32 %v1122, 1.0
    %v1124 = vrcp.pop %v1123
    %v1125 = vmul.f32 1.0, %v1124
    %v1127 = vrot.slane %v1005, 6
    %v1129 = vmul.f32 %v1118, %v1127
    %v1130 = vmul.f32 %v1112, %v1119
    %v1131 = vadd.f32 %v1129, %v1130
    %v1132 = vtanh.pop %v1131
    %v1133 = vmul.f32 %v1125, %v1132
    %v1134 = vpack.c.bf16 %v1133, %v1133
    %v1136 = vrot.slane %v1134, 1
    %1138 = vmatprep.subr.bf16.mxu0 %v334
    %1139 = vmatpush1.bf16.msra.mxu0 %v333
    %1140 = vmatprep.subr.bf16.mxu0 %v338
    %1141 = vmatpush1.bf16.msra.mxu0 %v337
    %1142 = vmatprep.subr.bf16.mxu0 %v342
    %1143 = vmatpush1.bf16.msra.mxu0 %v341
    %1144 = vmatprep.subr.bf16.mxu0 %v346
    %1145 = vmatpush1.bf16.msra.mxu0 %v345
    %1146 = vmatprep.subr.bf16.mxu0 %v350
    %1147 = vmatpush1.bf16.msra.mxu0 %v349
    %1148 = vmatprep.subr.bf16.mxu0 %v354
    %1149 = vmatpush1.bf16.msra.mxu0 %v353
    %1150 = vmatprep.subr.bf16.mxu0 %v358
    %1151 = vmatpush1.bf16.msra.mxu0 %v357
    %1152 = vmatprep.subr.bf16.mxu0 %v362
    %1153 = vmatpush1.bf16.msra.mxu0 %v361
    %1154 = vmatprep.subr.bf16.mxu0 0
    %1155 = vmatpush1.bf16.msra.mxu0 0
    %1156 = vmatprep.subr.bf16.mxu0 0
    %1157 = vmatpush1.bf16.msra.mxu0 0
    %1158 = vmatprep.subr.bf16.mxu0 0
    %1159 = vmatpush1.bf16.msra.mxu0 0
    %1160 = vmatprep.subr.bf16.mxu0 0
    %1161 = vmatpush1.bf16.msra.mxu0 0
    %1162 = vmatprep.subr.bf16.mxu0 0
    %1163 = vmatpush1.bf16.msra.mxu0 0
    %1164 = vmatprep.subr.bf16.mxu0 0
    %1165 = vmatpush1.bf16.msra.mxu0 0
    %1166 = vmatprep.subr.bf16.mxu0 0
    %1167 = vmatpush1.bf16.msra.mxu0 0
    %1168 = vmatprep.subr.bf16.mxu0 0
    %1169 = vmatpush1.bf16.msra.mxu0 0
    %1170 = vmatprep.mubr.bf16.mxu0 0
    %1171 = vmatmul.mubr.bf16.gmra.mrb[0].mxu0 %v1136
    %v1172 = vpop.f32.mrb[0].mxu0
    %v1173 = vadd.f32 0.0, %v1172
    %v1174 = vpop.f32.mrb[0].mxu0
    %v1175 = vadd.f32 0.0, %v1174
    %v1176 = vpop.f32.mrb[0].mxu0
    %v1177 = vpop.f32.mrb[0].mxu0
    %1178 = vdwg.mxu0
    %1179 = vmatprep.subr.bf16.mxu0 %v336
    %1180 = vmatpush1.bf16.msra.mxu0 %v335
    %1181 = vmatprep.subr.bf16.mxu0 %v340
    %1182 = vmatpush1.bf16.msra.mxu0 %v339
    %1183 = vmatprep.subr.bf16.mxu0 %v344
    %1184 = vmatpush1.bf16.msra.mxu0 %v343
    %1185 = vmatprep.subr.bf16.mxu0 %v348
    %1186 = vmatpush1.bf16.msra.mxu0 %v347
    %1187 = vmatprep.subr.bf16.mxu0 %v352
    %1188 = vmatpush1.bf16.msra.mxu0 %v351
    %1189 = vmatprep.subr.bf16.mxu0 %v356
    %1190 = vmatpush1.bf16.msra.mxu0 %v355
    %1191 = vmatprep.subr.bf16.mxu0 %v360
    %1192 = vmatpush1.bf16.msra.mxu0 %v359
    %1193 = vmatprep.subr.bf16.mxu0 %v364
    %1194 = vmatpush1.bf16.msra.mxu0 %v363
    %1195 = vmatprep.subr.bf16.mxu0 0
    %1196 = vmatpush1.bf16.msra.mxu0 0
    %1197 = vmatprep.subr.bf16.mxu0 0
    %1198 = vmatpush1.bf16.msra.mxu0 0
    %1199 = vmatprep.subr.bf16.mxu0 0
    %1200 = vmatpush1.bf16.msra.mxu0 0
    %1201 = vmatprep.subr.bf16.mxu0 0
    %1202 = vmatpush1.bf16.msra.mxu0 0
    %1203 = vmatprep.subr.bf16.mxu0 0
    %1204 = vmatpush1.bf16.msra.mxu0 0
    %1205 = vmatprep.subr.bf16.mxu0 0
    %1206 = vmatpush1.bf16.msra.mxu0 0
    %1207 = vmatprep.subr.bf16.mxu0 0
    %1208 = vmatpush1.bf16.msra.mxu0 0
    %1209 = vmatprep.subr.bf16.mxu0 0
    %1210 = vmatpush1.bf16.msra.mxu0 0
    %1211 = vmatprep.mubr.bf16.mxu0 0
    %1212 = vmatmul.mubr.bf16.gmra.mrb[0].mxu0 %v1136
    %v1213 = vpop.f32.mrb[0].mxu0
    %v1214 = vadd.f32 0.0, %v1213
    %v1215 = vpop.f32.mrb[0].mxu0
    %v1216 = vadd.f32 0.0, %v1215
    %v1217 = vpop.f32.mrb[0].mxu0
    %v1218 = vpop.f32.mrb[0].mxu0
    %1219 = vdwg.mxu0
    %v1224 = vrot.slane %v1173, 4
    %v1225 = vrot.slane %v1175, 4
    %v1226 = vrot.slane %v1214, 4
    %v1227 = vrot.slane %v1216, 4
    %v1232 = vadd.f32 %v158, %v1224
    %v1233 = vadd.f32 %v160, %v1225
    %v1234 = vadd.f32 %v201, %v1226
    %v1235 = vadd.f32 %v203, %v1227
    %v1236 = vxor.u32 %v1232, 2147483648
    %v1237 = vmul.f32 %v1236, 1.442695
    %v1238 = vpow.pop %v1237
    %v1239 = vadd.f32 %v1238, 1.0
    %v1240 = vrcp.pop %v1239
    %v1241 = vmul.f32 1.0, %v1240
    %v1242 = vxor.u32 %v1233, 2147483648
    %v1243 = vmul.f32 %v1242, 1.442695
    %v1244 = vpow.pop %v1243
    %v1245 = vadd.f32 %v1244, 1.0
    %v1246 = vrcp.pop %v1245
    %v1247 = vmul.f32 1.0, %v1246
    %v1248 = vtanh.pop %v1234
    %v1249 = vxor.u32 %v1235, 2147483648
    %v1250 = vmul.f32 %v1249, 1.442695
    %v1251 = vpow.pop %v1250
    %v1252 = vadd.f32 %v1251, 1.0
    %v1253 = vrcp.pop %v1252
    %v1254 = vmul.f32 1.0, %v1253
    %v1256 = vrot.slane %v1131, 6
    %v1258 = vmul.f32 %v1247, %v1256
    %v1259 = vmul.f32 %v1241, %v1248
    %v1260 = vadd.f32 %v1258, %v1259
    %v1261 = vtanh.pop %v1260
    %v1262 = vmul.f32 %v1254, %v1261
    %v1263 = vpack.c.bf16 %v1262, %v1262
    %v1265 = vrot.slane %v1263, 2
    %1267 = vmatprep.subr.bf16.mxu0 %v334
    %1268 = vmatpush1.bf16.msra.mxu0 %v333
    %1269 = vmatprep.subr.bf16.mxu0 %v338
    %1270 = vmatpush1.bf16.msra.mxu0 %v337
    %1271 = vmatprep.subr.bf16.mxu0 %v342
    %1272 = vmatpush1.bf16.msra.mxu0 %v341
    %1273 = vmatprep.subr.bf16.mxu0 %v346
    %1274 = vmatpush1.bf16.msra.mxu0 %v345
    %1275 = vmatprep.subr.bf16.mxu0 %v350
    %1276 = vmatpush1.bf16.msra.mxu0 %v349
    %1277 = vmatprep.subr.bf16.mxu0 %v354
    %1278 = vmatpush1.bf16.msra.mxu0 %v353
    %1279 = vmatprep.subr.bf16.mxu0 %v358
    %1280 = vmatpush1.bf16.msra.mxu0 %v357
    %1281 = vmatprep.subr.bf16.mxu0 %v362
    %1282 = vmatpush1.bf16.msra.mxu0 %v361
    %1283 = vmatprep.subr.bf16.mxu0 0
    %1284 = vmatpush1.bf16.msra.mxu0 0
    %1285 = vmatprep.subr.bf16.mxu0 0
    %1286 = vmatpush1.bf16.msra.mxu0 0
    %1287 = vmatprep.subr.bf16.mxu0 0
    %1288 = vmatpush1.bf16.msra.mxu0 0
    %1289 = vmatprep.subr.bf16.mxu0 0
    %1290 = vmatpush1.bf16.msra.mxu0 0
    %1291 = vmatprep.subr.bf16.mxu0 0
    %1292 = vmatpush1.bf16.msra.mxu0 0
    %1293 = vmatprep.subr.bf16.mxu0 0
    %1294 = vmatpush1.bf16.msra.mxu0 0
    %1295 = vmatprep.subr.bf16.mxu0 0
    %1296 = vmatpush1.bf16.msra.mxu0 0
    %1297 = vmatprep.subr.bf16.mxu0 0
    %1298 = vmatpush1.bf16.msra.mxu0 0
    %1299 = vmatprep.mubr.bf16.mxu0 0
    %1300 = vmatmul.mubr.bf16.gmra.mrb[0].mxu0 %v1265
    %v1301 = vpop.f32.mrb[0].mxu0
    %v1302 = vadd.f32 0.0, %v1301
    %v1303 = vpop.f32.mrb[0].mxu0
    %v1304 = vadd.f32 0.0, %v1303
    %v1305 = vpop.f32.mrb[0].mxu0
    %v1306 = vpop.f32.mrb[0].mxu0
    %1307 = vdwg.mxu0
    %1308 = vmatprep.subr.bf16.mxu0 %v336
    %1309 = vmatpush1.bf16.msra.mxu0 %v335
    %1310 = vmatprep.subr.bf16.mxu0 %v340
    %1311 = vmatpush1.bf16.msra.mxu0 %v339
    %1312 = vmatprep.subr.bf16.mxu0 %v344
    %1313 = vmatpush1.bf16.msra.mxu0 %v343
    %1314 = vmatprep.subr.bf16.mxu0 %v348
    %1315 = vmatpush1.bf16.msra.mxu0 %v347
    %1316 = vmatprep.subr.bf16.mxu0 %v352
    %1317 = vmatpush1.bf16.msra.mxu0 %v351
    %1318 = vmatprep.subr.bf16.mxu0 %v356
    %1319 = vmatpush1.bf16.msra.mxu0 %v355
    %1320 = vmatprep.subr.bf16.mxu0 %v360
    %1321 = vmatpush1.bf16.msra.mxu0 %v359
    %1322 = vmatprep.subr.bf16.mxu0 %v364
    %1323 = vmatpush1.bf16.msra.mxu0 %v363
    %1324 = vmatprep.subr.bf16.mxu0 0
    %1325 = vmatpush1.bf16.msra.mxu0 0
    %1326 = vmatprep.subr.bf16.mxu0 0
    %1327 = vmatpush1.bf16.msra.mxu0 0
    %1328 = vmatprep.subr.bf16.mxu0 0
    %1329 = vmatpush1.bf16.msra.mxu0 0
    %1330 = vmatprep.subr.bf16.mxu0 0
    %1331 = vmatpush1.bf16.msra.mxu0 0
    %1332 = vmatprep.subr.bf16.mxu0 0
    %1333 = vmatpush1.bf16.msra.mxu0 0
    %1334 = vmatprep.subr.bf16.mxu0 0
    %1335 = vmatpush1.bf16.msra.mxu0 0
    %1336 = vmatprep.subr.bf16.mxu0 0
    %1337 = vmatpush1.bf16.msra.mxu0 0
    %1338 = vmatprep.subr.bf16.mxu0 0
    %1339 = vmatpush1.bf16.msra.mxu0 0
    %1340 = vmatprep.mubr.bf16.mxu0 0
    %1341 = vmatmul.mubr.bf16.gmra.mrb[0].mxu0 %v1265
    %v1342 = vpop.f32.mrb[0].mxu0
    %v1343 = vadd.f32 0.0, %v1342
    %v1344 = vpop.f32.mrb[0].mxu0
    %v1345 = vadd.f32 0.0, %v1344
    %v1346 = vpop.f32.mrb[0].mxu0
    %v1347 = vpop.f32.mrb[0].mxu0
    %1348 = vdwg.mxu0
    %v1353 = vrot.slane %v1302, 2
    %v1354 = vrot.slane %v1304, 2
    %v1355 = vrot.slane %v1343, 2
    %v1356 = vrot.slane %v1345, 2
    %v1361 = vadd.f32 %v158, %v1353
    %v1362 = vadd.f32 %v160, %v1354
    %v1363 = vadd.f32 %v201, %v1355
    %v1364 = vadd.f32 %v203, %v1356
    %v1365 = vxor.u32 %v1361, 2147483648
    %v1366 = vmul.f32 %v1365, 1.442695
    %v1367 = vpow.pop %v1366
    %v1368 = vadd.f32 %v1367, 1.0
    %v1369 = vrcp.pop %v1368
    %v1370 = vmul.f32 1.0, %v1369
    %v1371 = vxor.u32 %v1362, 2147483648
    %v1372 = vmul.f32 %v1371, 1.442695
    %v1373 = vpow.pop %v1372
    %v1374 = vadd.f32 %v1373, 1.0
    %v1375 = vrcp.pop %v1374
    %v1376 = vmul.f32 1.0, %v1375
    %v1377 = vtanh.pop %v1363
    %v1378 = vxor.u32 %v1364, 2147483648
    %v1379 = vmul.f32 %v1378, 1.442695
    %v1380 = vpow.pop %v1379
    %v1381 = vadd.f32 %v1380, 1.0
    %v1382 = vrcp.pop %v1381
    %v1383 = vmul.f32 1.0, %v1382
    %v1385 = vrot.slane %v1260, 6
    %v1387 = vmul.f32 %v1376, %v1385
    %v1388 = vmul.f32 %v1370, %v1377
    %v1389 = vadd.f32 %v1387, %v1388
    %v1390 = vtanh.pop %v1389
    %v1391 = vmul.f32 %v1383, %v1390
    %vm1392 = vcmask 1041408
    %v1393 = vsel %vm1392, %v506, %v632
    %vm1394 = vcmask 1043456
    %v1395 = vsel %vm1394, %v1393, %v761
    %vm1396 = vcmask 1045504
    %v1397 = vsel %vm1396, %v1395, %v890
    %v1398 = vsel %vm1392, %v1007, %v1133
    %v1399 = vsel %vm1394, %v1398, %v1262
    %v1400 = vsel %vm1396, %v1399, %v1391
    %v1401 = vpack.c.bf16 %v1400, %v1397
    %v1402 = vld [vmem:[%s4] sm:$0xf]
    %v1403 = vld [vmem:[%s4 + $0x4] sm:$0xf]
    %v1404 = vld [vmem:[%s4 + $0x8] sm:$0xf]
    %v1405 = vld [vmem:[%s4 + $0xc] sm:$0xf]
    %v1406 = vld [vmem:[%s4 + $0x10] sm:$0xf]
    %v1407 = vld [vmem:[%s4 + $0x14] sm:$0xf]
    %v1408 = vld [vmem:[%s4 + $0x18] sm:$0xf]
    %v1409 = vld [vmem:[%s4 + $0x1c] sm:$0xf]
    %v1410 = vld [vmem:[%s4 + $0x20] sm:$0xf]
    %v1411 = vld [vmem:[%s4 + $0x24] sm:$0xf]
    %v1412 = vld [vmem:[%s4 + $0x28] sm:$0xf]
    %v1413 = vld [vmem:[%s4 + $0x2c] sm:$0xf]
    %v1414 = vld [vmem:[%s4 + $0x30] sm:$0xf]
    %v1415 = vld [vmem:[%s4 + $0x34] sm:$0xf]
    %v1416 = vld [vmem:[%s4 + $0x38] sm:$0xf]
    %v1417 = vld [vmem:[%s4 + $0x3c] sm:$0xf]
    %v1418 = vld [vmem:[%s5] sm:$0x1]
    %v1420 = vlaneseq
    %v1421 = vshrl.u32 %v1420, 7
    %v1422 = vsub.s32 0, %v1421
    %v1423 = vrot.slane %v1418, %v1422
    %v1441 = vunpack.c.l.b16 %v1402
    %v1442 = vunpack.c.l.b16 %v1403
    %v1443 = vunpack.c.l.b16 %v1404
    %v1444 = vunpack.c.l.b16 %v1405
    %v1445 = vunpack.c.l.b16 %v1406
    %v1446 = vunpack.c.l.b16 %v1407
    %v1447 = vunpack.c.l.b16 %v1408
    %v1448 = vunpack.c.l.b16 %v1409
    %v1449 = vunpack.c.l.b16 %v1410
    %v1450 = vunpack.c.l.b16 %v1411
    %v1451 = vunpack.c.l.b16 %v1412
    %v1452 = vunpack.c.l.b16 %v1413
    %v1453 = vunpack.c.l.b16 %v1414
    %v1454 = vunpack.c.l.b16 %v1415
    %v1455 = vunpack.c.l.b16 %v1416
    %v1456 = vunpack.c.l.b16 %v1417
    %v1457 = vpack.c.b16 %v1442, %v1441
    %v1458 = vpack.c.b16 %v1444, %v1443
    %v1459 = vpack.c.b16 %v1446, %v1445
    %v1460 = vpack.c.b16 %v1448, %v1447
    %v1461 = vpack.c.b16 %v1450, %v1449
    %v1462 = vpack.c.b16 %v1452, %v1451
    %v1463 = vpack.c.b16 %v1454, %v1453
    %v1464 = vpack.c.b16 %v1456, %v1455
    %1473 = vmatprep.subr.bf16.mxu0 0
    %1474 = vmatpush1.bf16.msra.mxu0 %v1457
    %1475 = vmatprep.subr.bf16.mxu0 0
    %1476 = vmatpush1.bf16.msra.mxu0 %v1458
    %1477 = vmatprep.subr.bf16.mxu0 0
    %1478 = vmatpush1.bf16.msra.mxu0 %v1459
    %1479 = vmatprep.subr.bf16.mxu0 0
    %1480 = vmatpush1.bf16.msra.mxu0 %v1460
    %1481 = vmatprep.subr.bf16.mxu0 0
    %1482 = vmatpush1.bf16.msra.mxu0 %v1461
    %1483 = vmatprep.subr.bf16.mxu0 0
    %1484 = vmatpush1.bf16.msra.mxu0 %v1462
    %1485 = vmatprep.subr.bf16.mxu0 0
    %1486 = vmatpush1.bf16.msra.mxu0 %v1463
    %1487 = vmatprep.subr.bf16.mxu0 0
    %1488 = vmatpush1.bf16.msra.mxu0 %v1464
    %1489 = vmatprep.subr.bf16.mxu0 0
    %1490 = vmatpush1.bf16.msra.mxu0 0
    %1491 = vmatprep.subr.bf16.mxu0 0
    %1492 = vmatpush1.bf16.msra.mxu0 0
    %1493 = vmatprep.subr.bf16.mxu0 0
    %1494 = vmatpush1.bf16.msra.mxu0 0
    %1495 = vmatprep.subr.bf16.mxu0 0
    %1496 = vmatpush1.bf16.msra.mxu0 0
    %1497 = vmatprep.subr.bf16.mxu0 0
    %1498 = vmatpush1.bf16.msra.mxu0 0
    %1499 = vmatprep.subr.bf16.mxu0 0
    %1500 = vmatpush1.bf16.msra.mxu0 0
    %1501 = vmatprep.subr.bf16.mxu0 0
    %1502 = vmatpush1.bf16.msra.mxu0 0
    %1503 = vmatprep.subr.bf16.mxu0 0
    %1504 = vmatpush1.bf16.msra.mxu0 0
    %1505 = vmatprep.mubr.bf16.mxu0 0
    %1506 = vmatmul.mubr.bf16.gmra.mrb[0].mxu0 %v1401
    %v1507 = vpop.f32.mrb[0].mxu0
    %v1508 = vadd.f32 %v1423, %v1507
    %v1509 = vpop.f32.mrb[0].mxu0
    %v1510 = vpop.f32.mrb[0].mxu0
    %v1511 = vadd.f32 %v1423, %v1510
    %v1512 = vpop.f32.mrb[0].mxu0
    %1513 = vdwg.mxu0
    %vm1514 = vcmask 523264
    %1515 = vst.msk [vmem:[%s6] sm:$0xff] %vm1514, %v1508
    %1516 = vst.msk [vmem:[%s6 + $0x8] sm:$0xff] %vm1514, %v1511
    // Predicated region
    $region30: #{lstm_encoder_forward.1} parent=1 // pred_check
      _
    $region31: #{lstm_encoder_forward.1} parent=1 // pred_check_branch
      %1518 = sbr.rel (0) target = $region33
    $region32: #{lstm_encoder_forward.1} parent=1 // pred_region
      _
    $region33: #{lstm_encoder_forward.1} parent=1 // pred_fallthru
      _
    // Predicated region
    $region34: #{lstm_encoder_forward.1} parent=1 // pred_check
      _
    $region35: #{lstm_encoder_forward.1} parent=1 // pred_check_branch
      %1520 = sbr.rel (0) target = $region37
    $region36: #{lstm_encoder_forward.1} parent=1 // pred_region
      _
    $region37: #{lstm_encoder_forward.1} parent=1 // pred_fallthru
      _
    %1521 = vsyncpa [#allocation3], 1

</llo_original>
